<compile_context>
chip_gen: v7x
topology: tpu7x:2x2x1
jax: 0.10.0
libtpu: 0.0.40
codegen_flags: <defaults>
</compile_context>

<pallas_src>
import jax
import jax.numpy as jnp
from jax import lax
from jax.experimental import pallas as pl
from jax.experimental.pallas import tpu as pltpu

EPS = 1e-5
U_DTYPE = jnp.float32  # TODO(synk): bf16 on v6e/v7x once 1e-4 parity is relaxed.


def _vmem_budgets():
    """(scoped_vmem_limit_bytes, per_block_budget_bytes) for this generation."""
    cap = 64 * 1024 * 1024
    try:
        info = pltpu.get_tpu_info()
        cap = int(getattr(info, "vmem_capacity_bytes", cap))
    except Exception:
        pass
    if cap >= 100 * 1024 * 1024:                  # v5e / v6e: 128 MiB VMEM / core
        return 96 * 1024 * 1024, 12 * 1024 * 1024
    return 48 * 1024 * 1024, 6 * 1024 * 1024      # v7x: 64 MiB VMEM / core


def _pick_images_per_block(n_images, bytes_per_image, budget):
    """Largest divisor of N whose block fits `budget`, preferring an EVEN number
    of grid steps (v7x has 2 TensorCores sharing the parallel axis), then >= 2
    steps (so the BlockSpec pipeline can overlap DMA), then the largest block."""
    divisors = [d for d in range(n_images, 0, -1) if n_images % d == 0]
    fitting = [d for d in divisors if d * bytes_per_image <= budget] or [1]
    for pred in (lambda d: (n_images // d) >= 2 and (n_images // d) % 2 == 0,
                 lambda d: (n_images // d) >= 2,
                 lambda d: True):
        for d in fitting:                          # descending: biggest block first
            if pred(d):
                return d
    return 1


# ----------------------------------------------------------------------------
# Kernel A: fused BN1 + ReLU + 1x1 conv (NCHW-native), plus per-block partial
# sums for the BN2 batch statistics (computed on the MXU).
#   x_flat : (N, Cin, HW)    scale1/shift1 : (Cin, 1)    w1m : (C1, Cin)
#   u_flat : (N, C1, HW)     stats : (num_blocks, C1, 2)  [sum(u), sum(u^2)]
# ----------------------------------------------------------------------------
def _bn_relu_conv1x1(x_flat, scale1, shift1, w1m, vmem_limit, block_budget):
    N, Cin, HW = x_flat.shape
    C1 = w1m.shape[0]
    u_bytes = jnp.dtype(U_DTYPE).itemsize
    # inputs/outputs are double-buffered (x2) + one image worth of f32 temporaries
    per_img = HW * (4 * (3 * Cin + 3 * C1) + 2 * u_bytes * C1)
    na = _pick_images_per_block(N, per_img, block_budget)
    num_blocks = N // na

    def kernel(x_ref, s_ref, t_ref, w_ref, u_ref, st_ref):
        # Hoisted loop invariants (JAX does not CSE broadcast_in_dim).
        s = jnp.broadcast_to(s_ref[...], (Cin, HW))
        t = jnp.broadcast_to(t_ref[...], (Cin, HW))
        w = w_ref[...]
        ones_col = jnp.ones((HW, 1), jnp.float32)   # lane reduction via the MXU

        def body(b, carry):
            su, su2 = carry
            a = jnp.maximum(x_ref[b] * s + t, 0.0)               # (Cin, HW)
            if Cin <= 8:
                # Tiny Cin: MXU would be ~97% idle -> VPU broadcast-FMA path.
                u = w[:, 0:1] * a[0:1, :]
                for c in range(1, Cin):
                    u = u + w[:, c:c + 1] * a[c:c + 1, :]
            else:
                u = jnp.dot(w, a, preferred_element_type=jnp.float32)
            u_ref[b] = u.astype(u_ref.dtype)
            # BN2 partial sums: ride the MXU instead of XLU cross-lane reduces.
            su = su + jnp.dot(u, ones_col, preferred_element_type=jnp.float32)
            su2 = su2 + jnp.dot(u * u, ones_col, preferred_element_type=jnp.float32)
            return su, su2

        init = (jnp.zeros((C1, 1), jnp.float32), jnp.zeros((C1, 1), jnp.float32))
        su, su2 = lax.fori_loop(0, na, body, init, unroll=(na <= 4))
        st_ref[0] = jnp.concatenate([su, su2], axis=1)            # (C1, 2)

    u_flat, stats = pl.pallas_call(
        kernel,
        out_shape=(
            jax.ShapeDtypeStruct((N, C1, HW), U_DTYPE),
            jax.ShapeDtypeStruct((num_blocks, C1, 2), jnp.float32),
        ),
        grid=(num_blocks,),
        in_specs=[
            pl.BlockSpec((na, Cin, HW), lambda i: (i, 0, 0)),
            pl.BlockSpec((Cin, 1), lambda i: (0, 0)),
            pl.BlockSpec((Cin, 1), lambda i: (0, 0)),
            pl.BlockSpec((C1, Cin), lambda i: (0, 0)),
        ],
        out_specs=(
            pl.BlockSpec((na, C1, HW), lambda i: (i, 0, 0)),
            pl.BlockSpec((1, C1, 2), lambda i: (i, 0, 0)),
        ),
        compiler_params=pltpu.CompilerParams(
            dimension_semantics=("parallel",),
            vmem_limit_bytes=vmem_limit,
        ),
    )(x_flat, scale1, shift1, w1m)
    return u_flat, stats


# ----------------------------------------------------------------------------
# Kernel B: fused BN2 + ReLU + 3x3 conv (padding=1) + channel concat with x,
# writing [conv_out ; x] straight into the final (N, G+Cin, HW) output.
#   u_flat : (N, C1, HW)   scale2/shift2 : (C1, 1)   w2t : (G, 9*C1)
#   x_flat : (N, Cin, HW)
# ----------------------------------------------------------------------------
def _bn_relu_conv3x3_cat(u_flat, scale2, shift2, w2t, x_flat, H, W,
                         vmem_limit, block_budget):
    N, C1, HW = u_flat.shape
    Cin = x_flat.shape[1]
    G = w2t.shape[0]
    u_bytes = jnp.dtype(u_flat.dtype).itemsize
    # Double-buffered streams (x2 on u, x, out) + live f32 temporaries per image:
    # a + two pre-masked copies + (full im2col if C1<64 else one tap+acc) + conv.
    temp_ch = 3 * C1 + (9 * C1 if C1 < 64 else 2 * C1) + G
    per_img = HW * (2 * u_bytes * C1 + 4 * (2 * Cin + 2 * (G + Cin) + temp_ch))
    nb = _pick_images_per_block(N, per_img, block_budget)
    num_blocks = N // nb

    def kernel(u_ref, s_ref, t_ref, w_ref, x_ref, o_ref):
        # Hoisted loop invariants.
        s = jnp.broadcast_to(s_ref[...], (C1, HW))
        t = jnp.broadcast_to(t_ref[...], (C1, HW))
        w = w_ref[...]
        # In-kernel horizontal boundary masks (no extra DMA input streams).
        col_idx = lax.broadcasted_iota(jnp.int32, (1, HW), 1) % W
        keep_dx0 = (col_idx != (W - 1)).astype(jnp.float32)  # src col W-1 invalid for dx=0
        keep_dx2 = (col_idx != 0).astype(jnp.float32)        # src col 0   invalid for dx=2

        def shift_flat(src, sh):
            if sh > 0:
                return jnp.concatenate(
                    [src[:, sh:], jnp.zeros((C1, sh), jnp.float32)], axis=1)
            if sh < 0:
                return jnp.concatenate(
                    [jnp.zeros((C1, -sh), jnp.float32), src[:, :HW + sh]], axis=1)
            return src

        def per_image(b, carry):
            a = jnp.maximum(u_ref[b].astype(jnp.float32) * s + t, 0.0)  # (C1, HW)
            # Pre-mask the SOURCE once per dx: dx=0 taps only ever read source
            # column W-1 for invalid (x==0) outputs; dx=2 taps only read source
            # column 0 for invalid (x==W-1) outputs.  Vertical boundaries are
            # handled by the zero padding of the flat shifts.
            srcs = (a * keep_dx0, a, a * keep_dx2)

            def tap(dy, dx):
                return shift_flat(srcs[dx], (dy - 1) * W + (dx - 1))

            if C1 >= 64:
                # Deep K: 9 accumulating dots; only ONE (C1, HW) tap live at a time.
                conv = jnp.zeros((G, HW), jnp.float32)
                k = 0
                for dy in range(3):
                    for dx in range(3):
                        conv = conv + jnp.dot(
                            w[:, k * C1:(k + 1) * C1], tap(dy, dx),
                            preferred_element_type=jnp.float32)
                        k += 1
            else:
                # Shallow K (< 64): a single K=9*C1 dot keeps the MXU fed; the
                # materialized im2col is tiny in this regime.
                col = jnp.concatenate(
                    [tap(dy, dx) for dy in range(3) for dx in range(3)], axis=0)
                conv = jnp.dot(w, col, preferred_element_type=jnp.float32)

            o_ref[b, pl.ds(0, G), :] = conv.astype(o_ref.dtype)
            # Channel-concat passthrough of x.  (G is a multiple of 8 in typical
            # DenseNets, keeping this store sublane-aligned.)
            # TODO(synk): across DenseNet layers, pre-allocate the concatenated
            # slab and alias it (input_output_aliases) so x is never re-copied.
            o_ref[b, pl.ds(G, Cin), :] = x_ref[b].astype(o_ref.dtype)
            return carry

        lax.fori_loop(0, nb, per_image, 0)

    out_flat = pl.pallas_call(
        kernel,
        out_shape=jax.ShapeDtypeStruct((N, G + Cin, HW), jnp.float32),
        grid=(num_blocks,),
        in_specs=[
            pl.BlockSpec((nb, C1, HW), lambda i: (i, 0, 0)),
            pl.BlockSpec((C1, 1), lambda i: (0, 0)),
            pl.BlockSpec((C1, 1), lambda i: (0, 0)),
            pl.BlockSpec((G, 9 * C1), lambda i: (0, 0)),
            pl.BlockSpec((nb, Cin, HW), lambda i: (i, 0, 0)),
        ],
        out_specs=pl.BlockSpec((nb, G + Cin, HW), lambda i: (i, 0, 0)),
        compiler_params=pltpu.CompilerParams(
            dimension_semantics=("parallel",),
            vmem_limit_bytes=vmem_limit,
        ),
    )(u_flat, scale2, shift2, w2t, x_flat)
    return out_flat


# ----------------------------------------------------------------------------
# Bottleneck forward (NCHW in / NCHW out, matching PyTorch)
# ----------------------------------------------------------------------------
def bottleneck_forward(x_nchw, params):
    g1, b1, w1, g2, b2, w2 = (params[k] for k in ("g1", "b1", "w1", "g2", "b2", "w2"))
    N, Cin, H, W = x_nchw.shape
    C1 = w1.shape[0]                 # 4 * growth_rate   (w1 OIHW: (C1, Cin, 1, 1))
    G = w2.shape[0]                  # growth_rate       (w2 OIHW: (G, C1, 3, 3))
    HW = H * W
    M = N * HW

    vmem_limit, block_budget = _vmem_budgets()

    x_flat = x_nchw.reshape(N, Cin, HW)                  # free reshape (NCHW-native)

    # BN1 batch statistics (training mode, biased variance) -- tiny XLA glue.
    mean1 = jnp.mean(x_nchw, axis=(0, 2, 3))
    var1 = jnp.var(x_nchw, axis=(0, 2, 3))
    scale1 = (g1 / jnp.sqrt(var1 + EPS))[:, None]        # (Cin, 1)
    shift1 = b1[:, None] - mean1[:, None] * scale1

    w1m = w1.reshape(C1, Cin)

    # Kernel A: BN1 + ReLU + 1x1 conv, with fused partial sums for BN2 stats.
    u_flat, stats = _bn_relu_conv1x1(x_flat, scale1, shift1, w1m,
                                     vmem_limit, block_budget)

    # BN2 batch statistics from the fused partial sums (biased variance).
    # Note: E[u^2]-E[u]^2 with a clamp; adequate at these activation scales.
    sum_u = jnp.sum(stats[:, :, 0], axis=0)
    sum_u2 = jnp.sum(stats[:, :, 1], axis=0)
    mean2 = sum_u / M
    var2 = jnp.maximum(sum_u2 / M - mean2 * mean2, 0.0)
    scale2 = (g2 / jnp.sqrt(var2 + EPS))[:, None]        # (C1, 1)
    shift2 = b2[:, None] - mean2[:, None] * scale2

    # Weights reshaped to the im2col tap ordering (dy, dx, c) used by kernel B.
    w2t = jnp.transpose(w2, (0, 2, 3, 1)).reshape(G, 9 * C1)

    # Kernel B: BN2 + ReLU + 3x3 conv + channel concat with x.
    out_flat = _bn_relu_conv3x3_cat(u_flat, scale2, shift2, w2t, x_flat,
                                    H, W, vmem_limit, block_budget)
    return out_flat.reshape(N, G + Cin, H, W)


# ----------------------------------------------------------------------------
# Pure-JAX reference (mirrors the PyTorch module exactly) for validation
# ----------------------------------------------------------------------------
def bottleneck_reference(x, params):
    g1, b1, w1, g2, b2, w2 = (params[k] for k in ("g1", "b1", "w1", "g2", "b2", "w2"))

    def bn_train(t, g, b):
        m = jnp.mean(t, axis=(0, 2, 3), keepdims=True)
        v = jnp.var(t, axis=(0, 2, 3), keepdims=True)
        return (t - m) / jnp.sqrt(v + EPS) * g[None, :, None, None] + b[None, :, None, None]

    y = jnp.maximum(bn_train(x, g1, b1), 0.0)
    u = lax.conv_general_dilated(y, w1, (1, 1), "VALID",
                                 dimension_numbers=("NCHW", "OIHW", "NCHW"))
    z = jnp.maximum(bn_train(u, g2, b2), 0.0)
    o = lax.conv_general_dilated(z, w2, (1, 1), ((1, 1), (1, 1)),
                                 dimension_numbers=("NCHW", "OIHW", "NCHW"))
    return jnp.concatenate([o, x], axis=1)


if __name__ == "__main__":
    # Small shapes consistent with the module: batch=2, in_planes=4,
    # growth_rate=8, spatial=16x16.
    N, Cin, H, W = 2, 4, 16, 16
    growth = 8
    C1 = 4 * growth

    key = jax.random.PRNGKey(0)
    k_x, k_w1, k_w2, k_g1, k_b1, k_g2, k_b2 = jax.random.split(key, 7)

    x = jax.random.normal(k_x, (N, Cin, H, W), dtype=jnp.float32)

    params = dict(
        g1=1.0 + 0.1 * jax.random.normal(k_g1, (Cin,), dtype=jnp.float32),
        b1=0.1 * jax.random.normal(k_b1, (Cin,), dtype=jnp.float32),
        w1=jax.random.normal(k_w1, (C1, Cin, 1, 1), dtype=jnp.float32)
        * (2.0 / Cin) ** 0.5,
        g2=1.0 + 0.1 * jax.random.normal(k_g2, (C1,), dtype=jnp.float32),
        b2=0.1 * jax.random.normal(k_b2, (C1,), dtype=jnp.float32),
        w2=jax.random.normal(k_w2, (growth, C1, 3, 3), dtype=jnp.float32)
        * (2.0 / (C1 * 9)) ** 0.5,
    )

    fwd = jax.jit(bottleneck_forward)
    ref_fn = jax.jit(bottleneck_reference)

    out = jax.block_until_ready(fwd(x, params))
    ref = jax.block_until_ready(ref_fn(x, params))

    assert out.shape == (N, growth + Cin, H, W), out.shape
    err = float(jnp.max(jnp.abs(out - ref)))
    assert jnp.allclose(out, ref, atol=1e-4, rtol=1e-4), err
    print("KERNEL_OK")
</pallas_src>

<mosaic_0001>
module attributes {stable_mosaic.version = 11 : i64} {
  func.func @kernel(%arg0: i32, %arg1: memref<1x4x256xf32, #tpu.memory_space<vmem>>, %arg2: memref<4x1xf32, #tpu.memory_space<vmem>>, %arg3: memref<4x1xf32, #tpu.memory_space<vmem>>, %arg4: memref<32x4xf32, #tpu.memory_space<vmem>>, %arg5: memref<1x32x256xf32, #tpu.memory_space<vmem>>, %arg6: memref<1x32x2xf32, #tpu.memory_space<vmem>>) attributes {dimension_semantics = [#tpu.dimension_semantics<parallel>], iteration_bounds = array<i64: 2>, scalar_prefetch = 0 : i64, scratch_operands = 0 : i64, tpu.core_type = #tpu.core_type<tc>, window_params = [{transform_indices = @transform_0, window_bounds = array<i64: 1, 4, 256>}, {pipeline_mode = #tpu.pipeline_mode<synchronous>, transform_indices = @transform_1, window_bounds = array<i64: 4, 1>}, {pipeline_mode = #tpu.pipeline_mode<synchronous>, transform_indices = @transform_2, window_bounds = array<i64: 4, 1>}, {pipeline_mode = #tpu.pipeline_mode<synchronous>, transform_indices = @transform_3, window_bounds = array<i64: 32, 4>}, {transform_indices = @transform_4, window_bounds = array<i64: 1, 32, 256>}, {transform_indices = @transform_5, window_bounds = array<i64: 1, 32, 2>}]} {
    %c0 = arith.constant 0 : index
    %c0_0 = arith.constant 0 : index
    %0 = vector.load %arg2[%c0, %c0_0] : memref<4x1xf32, #tpu.memory_space<vmem>>, vector<4x1xf32>
    %1 = vector.shape_cast %0 : vector<4x1xf32> to vector<4x1xf32>
    %2 = vector.broadcast %1 : vector<4x1xf32> to vector<4x256xf32>
    %c0_1 = arith.constant 0 : index
    %c0_2 = arith.constant 0 : index
    %3 = vector.load %arg3[%c0_1, %c0_2] : memref<4x1xf32, #tpu.memory_space<vmem>>, vector<4x1xf32>
    %4 = vector.shape_cast %3 : vector<4x1xf32> to vector<4x1xf32>
    %5 = vector.broadcast %4 : vector<4x1xf32> to vector<4x256xf32>
    %c0_3 = arith.constant 0 : index
    %c0_4 = arith.constant 0 : index
    %6 = vector.load %arg4[%c0_3, %c0_4] : memref<32x4xf32, #tpu.memory_space<vmem>>, vector<32x4xf32>
    %cst = arith.constant 1.000000e+00 : f32
    %7 = vector.broadcast %cst : f32 to vector<256x1xf32>
    %cst_5 = arith.constant 0.000000e+00 : f32
    %8 = vector.broadcast %cst_5 : f32 to vector<32x1xf32>
    %cst_6 = arith.constant 0.000000e+00 : f32
    %9 = vector.broadcast %cst_6 : f32 to vector<32x1xf32>
    %c0_i32 = arith.constant 0 : i32
    %10 = arith.index_cast %c0_i32 : i32 to index
    %c0_7 = arith.constant 0 : index
    %c0_8 = arith.constant 0 : index
    %11 = vector.load %arg1[%10, %c0_7, %c0_8] : memref<1x4x256xf32, #tpu.memory_space<vmem>>, vector<1x4x256xf32>
    %12 = vector.shape_cast %11 : vector<1x4x256xf32> to vector<4x256xf32>
    %13 = arith.mulf %12, %2 : vector<4x256xf32>
    %14 = arith.addf %13, %5 : vector<4x256xf32>
    %cst_9 = arith.constant 0.000000e+00 : f32
    %15 = vector.broadcast %cst_9 : f32 to vector<4x256xf32>
    %16 = arith.maximumf %14, %15 : vector<4x256xf32>
    %17 = vector.extract_strided_slice %6 {offsets = [0, 0], sizes = [32, 1], strides = [1, 1]} : vector<32x4xf32> to vector<32x1xf32>
    %18 = vector.extract_strided_slice %16 {offsets = [0, 0], sizes = [1, 256], strides = [1, 1]} : vector<4x256xf32> to vector<1x256xf32>
    %19 = vector.broadcast %17 : vector<32x1xf32> to vector<32x256xf32>
    %20 = vector.broadcast %18 : vector<1x256xf32> to vector<32x256xf32>
    %21 = arith.mulf %19, %20 : vector<32x256xf32>
    %22 = vector.extract_strided_slice %6 {offsets = [0, 1], sizes = [32, 1], strides = [1, 1]} : vector<32x4xf32> to vector<32x1xf32>
    %23 = vector.extract_strided_slice %16 {offsets = [1, 0], sizes = [1, 256], strides = [1, 1]} : vector<4x256xf32> to vector<1x256xf32>
    %24 = vector.broadcast %22 : vector<32x1xf32> to vector<32x256xf32>
    %25 = vector.broadcast %23 : vector<1x256xf32> to vector<32x256xf32>
    %26 = arith.mulf %24, %25 : vector<32x256xf32>
    %27 = arith.addf %21, %26 : vector<32x256xf32>
    %28 = vector.extract_strided_slice %6 {offsets = [0, 2], sizes = [32, 1], strides = [1, 1]} : vector<32x4xf32> to vector<32x1xf32>
    %29 = vector.extract_strided_slice %16 {offsets = [2, 0], sizes = [1, 256], strides = [1, 1]} : vector<4x256xf32> to vector<1x256xf32>
    %30 = vector.broadcast %28 : vector<32x1xf32> to vector<32x256xf32>
    %31 = vector.broadcast %29 : vector<1x256xf32> to vector<32x256xf32>
    %32 = arith.mulf %30, %31 : vector<32x256xf32>
    %33 = arith.addf %27, %32 : vector<32x256xf32>
    %34 = vector.extract_strided_slice %6 {offsets = [0, 3], sizes = [32, 1], strides = [1, 1]} : vector<32x4xf32> to vector<32x1xf32>
    %35 = vector.extract_strided_slice %16 {offsets = [3, 0], sizes = [1, 256], strides = [1, 1]} : vector<4x256xf32> to vector<1x256xf32>
    %36 = vector.broadcast %34 : vector<32x1xf32> to vector<32x256xf32>
    %37 = vector.broadcast %35 : vector<1x256xf32> to vector<32x256xf32>
    %38 = arith.mulf %36, %37 : vector<32x256xf32>
    %39 = arith.addf %33, %38 : vector<32x256xf32>
    %40 = arith.index_cast %c0_i32 : i32 to index
    %c0_10 = arith.constant 0 : index
    %c0_11 = arith.constant 0 : index
    %41 = vector.load %arg5[%40, %c0_10, %c0_11] : memref<1x32x256xf32, #tpu.memory_space<vmem>>, vector<1x32x256xf32>
    %42 = vector.shape_cast %41 : vector<1x32x256xf32> to vector<32x256xf32>
    %43 = vector.shape_cast %39 : vector<32x256xf32> to vector<1x32x256xf32>
    tpu.vector_store %arg5[%40, %c0_10, %c0_11], %43 {strides = array<i32>} : memref<1x32x256xf32, #tpu.memory_space<vmem>>, vector<1x32x256xf32>,
    %cst_12 = arith.constant dense<0.000000e+00> : vector<32x1xf32>
    %44 = tpu.matmul %39, %7, %cst_12 {dimension_numbers = #tpu.dot_dimension_numbers<[1], [0], [0], [1], [0, 0, 1, 1], [], []>} : vector<32x256xf32>, vector<256x1xf32>, vector<32x1xf32> -> vector<32x1xf32>
    %45 = arith.addf %8, %44 : vector<32x1xf32>
    %46 = arith.mulf %39, %39 : vector<32x256xf32>
    %cst_13 = arith.constant dense<0.000000e+00> : vector<32x1xf32>
    %47 = tpu.matmul %46, %7, %cst_13 {dimension_numbers = #tpu.dot_dimension_numbers<[1], [0], [0], [1], [0, 0, 1, 1], [], []>} : vector<32x256xf32>, vector<256x1xf32>, vector<32x1xf32> -> vector<32x1xf32>
    %48 = arith.addf %9, %47 : vector<32x1xf32>
    %c1_i32 = arith.constant 1 : i32
    %49 = tpu.concatenate %45, %48 in 1 : vector<32x1xf32>, vector<32x1xf32> -> vector<32x2xf32>
    %c0_14 = arith.constant 0 : index
    %c0_15 = arith.constant 0 : index
    %c0_16 = arith.constant 0 : index
    %50 = vector.load %arg6[%c0_14, %c0_15, %c0_16] : memref<1x32x2xf32, #tpu.memory_space<vmem>>, vector<1x32x2xf32>
    %51 = vector.shape_cast %50 : vector<1x32x2xf32> to vector<32x2xf32>
    %52 = vector.shape_cast %49 : vector<32x2xf32> to vector<1x32x2xf32>
    tpu.vector_store %arg6[%c0_14, %c0_15, %c0_16], %52 {strides = array<i32>} : memref<1x32x2xf32, #tpu.memory_space<vmem>>, vector<1x32x2xf32>,
    return
  }
  func.func @transform_0(%arg0: i32) -> (i32, i32, i32) {
    %c0_i32 = arith.constant 0 : i32
    %c0_i32_0 = arith.constant 0 : i32
    %c0_i32_1 = arith.constant 0 : i32
    return %arg0, %c0_i32, %c0_i32_0 : i32, i32, i32
  }
  func.func @transform_1(%arg0: i32) -> (i32, i32) {
    %c0_i32 = arith.constant 0 : i32
    %c0_i32_0 = arith.constant 0 : i32
    %c0_i32_1 = arith.constant 0 : i32
    return %c0_i32, %c0_i32_0 : i32, i32
  }
  func.func @transform_2(%arg0: i32) -> (i32, i32) {
    %c0_i32 = arith.constant 0 : i32
    %c0_i32_0 = arith.constant 0 : i32
    %c0_i32_1 = arith.constant 0 : i32
    return %c0_i32, %c0_i32_0 : i32, i32
  }
  func.func @transform_3(%arg0: i32) -> (i32, i32) {
    %c0_i32 = arith.constant 0 : i32
    %c0_i32_0 = arith.constant 0 : i32
    %c0_i32_1 = arith.constant 0 : i32
    return %c0_i32, %c0_i32_0 : i32, i32
  }
  func.func @transform_4(%arg0: i32) -> (i32, i32, i32) {
    %c0_i32 = arith.constant 0 : i32
    %c0_i32_0 = arith.constant 0 : i32
    %c0_i32_1 = arith.constant 0 : i32
    return %arg0, %c0_i32, %c0_i32_0 : i32, i32, i32
  }
  func.func @transform_5(%arg0: i32) -> (i32, i32, i32) {
    %c0_i32 = arith.constant 0 : i32
    %c0_i32_0 = arith.constant 0 : i32
    %c0_i32_1 = arith.constant 0 : i32
    return %arg0, %c0_i32, %c0_i32_0 : i32, i32, i32
  }
}

module attributes {stable_mosaic.version = 11 : i64} {
  func.func @kernel(%arg0: i32, %arg1: memref<1x32x256xf32, #tpu.memory_space<vmem>>, %arg2: memref<32x1xf32, #tpu.memory_space<vmem>>, %arg3: memref<32x1xf32, #tpu.memory_space<vmem>>, %arg4: memref<8x288xf32, #tpu.memory_space<vmem>>, %arg5: memref<1x4x256xf32, #tpu.memory_space<vmem>>, %arg6: memref<1x12x256xf32, #tpu.memory_space<vmem>>) attributes {dimension_semantics = [#tpu.dimension_semantics<parallel>], iteration_bounds = array<i64: 2>, scalar_prefetch = 0 : i64, scratch_operands = 0 : i64, tpu.core_type = #tpu.core_type<tc>, window_params = [{transform_indices = @transform_0, window_bounds = array<i64: 1, 32, 256>}, {pipeline_mode = #tpu.pipeline_mode<synchronous>, transform_indices = @transform_1, window_bounds = array<i64: 32, 1>}, {pipeline_mode = #tpu.pipeline_mode<synchronous>, transform_indices = @transform_2, window_bounds = array<i64: 32, 1>}, {pipeline_mode = #tpu.pipeline_mode<synchronous>, transform_indices = @transform_3, window_bounds = array<i64: 8, 288>}, {transform_indices = @transform_4, window_bounds = array<i64: 1, 4, 256>}, {transform_indices = @transform_5, window_bounds = array<i64: 1, 12, 256>}]} {
    %c0 = arith.constant 0 : index
    %c0_0 = arith.constant 0 : index
    %0 = vector.load %arg2[%c0, %c0_0] : memref<32x1xf32, #tpu.memory_space<vmem>>, vector<32x1xf32>
    %1 = vector.shape_cast %0 : vector<32x1xf32> to vector<32x1xf32>
    %2 = vector.broadcast %1 : vector<32x1xf32> to vector<32x256xf32>
    %c0_1 = arith.constant 0 : index
    %c0_2 = arith.constant 0 : index
    %3 = vector.load %arg3[%c0_1, %c0_2] : memref<32x1xf32, #tpu.memory_space<vmem>>, vector<32x1xf32>
    %4 = vector.shape_cast %3 : vector<32x1xf32> to vector<32x1xf32>
    %5 = vector.broadcast %4 : vector<32x1xf32> to vector<32x256xf32>
    %c0_3 = arith.constant 0 : index
    %c0_4 = arith.constant 0 : index
    %6 = vector.load %arg4[%c0_3, %c0_4] : memref<8x288xf32, #tpu.memory_space<vmem>>, vector<8x288xf32>
    %7 = tpu.iota {dimensions = array<i32: 1>} : vector<1x256xi32>
    %c16_i32 = arith.constant 16 : i32
    %c0_i32 = arith.constant 0 : i32
    %8 = arith.cmpi eq, %c16_i32, %c0_i32 : i32
    %c1_i32 = arith.constant 1 : i32
    %9 = arith.select %8, %c1_i32, %c16_i32 : i32
    %10 = vector.broadcast %9 : i32 to vector<1x256xi32>
    %11 = arith.remsi %7, %10 : vector<1x256xi32>
    %c0_i32_5 = arith.constant 0 : i32
    %12 = vector.broadcast %c0_i32_5 : i32 to vector<1x256xi32>
    %13 = arith.cmpi ne, %11, %12 : vector<1x256xi32>
    %c0_i32_6 = arith.constant 0 : i32
    %14 = vector.broadcast %c0_i32_6 : i32 to vector<1x256xi32>
    %15 = arith.cmpi slt, %11, %14 : vector<1x256xi32>
    %c0_i32_7 = arith.constant 0 : i32
    %16 = arith.cmpi slt, %9, %c0_i32_7 : i32
    %17 = vector.broadcast %16 : i1 to vector<1x256xi1>
    %18 = vector.broadcast %17 : vector<1x256xi1> to vector<1x256xi1>
    %19 = arith.xori %15, %18 : vector<1x256xi1>
    %20 = arith.andi %19, %13 : vector<1x256xi1>
    %21 = vector.broadcast %9 : i32 to vector<1x256xi32>
    %22 = arith.addi %11, %21 : vector<1x256xi32>
    %23 = arith.select %20, %22, %11 : vector<1x256xi1>, vector<1x256xi32>
    %c15_i32 = arith.constant 15 : i32
    %24 = vector.broadcast %c15_i32 : i32 to vector<1x256xi32>
    %25 = arith.cmpi ne, %23, %24 : vector<1x256xi32>
    %26 = arith.extui %25 : vector<1x256xi1> to vector<1x256xi32>
    %27 = arith.sitofp %26 : vector<1x256xi32> to vector<1x256xf32>
    %c0_i32_8 = arith.constant 0 : i32
    %28 = vector.broadcast %c0_i32_8 : i32 to vector<1x256xi32>
    %29 = arith.cmpi ne, %23, %28 : vector<1x256xi32>
    %30 = arith.extui %29 : vector<1x256xi1> to vector<1x256xi32>
    %31 = arith.sitofp %30 : vector<1x256xi32> to vector<1x256xf32>
    %c0_i32_9 = arith.constant 0 : i32
    %32 = arith.index_cast %c0_i32_9 : i32 to index
    %c0_10 = arith.constant 0 : index
    %c0_11 = arith.constant 0 : index
    %33 = vector.load %arg1[%32, %c0_10, %c0_11] : memref<1x32x256xf32, #tpu.memory_space<vmem>>, vector<1x32x256xf32>
    %34 = vector.shape_cast %33 : vector<1x32x256xf32> to vector<32x256xf32>
    %35 = arith.mulf %34, %2 : vector<32x256xf32>
    %36 = arith.addf %35, %5 : vector<32x256xf32>
    %cst = arith.constant 0.000000e+00 : f32
    %37 = vector.broadcast %cst : f32 to vector<32x256xf32>
    %38 = arith.maximumf %36, %37 : vector<32x256xf32>
    %39 = vector.broadcast %27 : vector<1x256xf32> to vector<32x256xf32>
    %40 = arith.mulf %38, %39 : vector<32x256xf32>
    %41 = vector.broadcast %31 : vector<1x256xf32> to vector<32x256xf32>
    %42 = arith.mulf %38, %41 : vector<32x256xf32>
    %cst_12 = arith.constant 0.000000e+00 : f32
    %43 = vector.broadcast %cst_12 : f32 to vector<32x17xf32>
    %44 = vector.extract_strided_slice %40 {offsets = [0, 0], sizes = [32, 239], strides = [1, 1]} : vector<32x256xf32> to vector<32x239xf32>
    %45 = tpu.concatenate %43, %44 in 1 : vector<32x17xf32>, vector<32x239xf32> -> vector<32x256xf32>
    %cst_13 = arith.constant 0.000000e+00 : f32
    %46 = vector.broadcast %cst_13 : f32 to vector<32x16xf32>
    %47 = vector.extract_strided_slice %38 {offsets = [0, 0], sizes = [32, 240], strides = [1, 1]} : vector<32x256xf32> to vector<32x240xf32>
    %48 = tpu.concatenate %46, %47 in 1 : vector<32x16xf32>, vector<32x240xf32> -> vector<32x256xf32>
    %cst_14 = arith.constant 0.000000e+00 : f32
    %49 = vector.broadcast %cst_14 : f32 to vector<32x15xf32>
    %50 = vector.extract_strided_slice %42 {offsets = [0, 0], sizes = [32, 241], strides = [1, 1]} : vector<32x256xf32> to vector<32x241xf32>
    %51 = tpu.concatenate %49, %50 in 1 : vector<32x15xf32>, vector<32x241xf32> -> vector<32x256xf32>
    %cst_15 = arith.constant 0.000000e+00 : f32
    %52 = vector.broadcast %cst_15 : f32 to vector<32x1xf32>
    %53 = vector.extract_strided_slice %40 {offsets = [0, 0], sizes = [32, 255], strides = [1, 1]} : vector<32x256xf32> to vector<32x255xf32>
    %54 = tpu.concatenate %52, %53 in 1 : vector<32x1xf32>, vector<32x255xf32> -> vector<32x256xf32>
    %55 = vector.extract_strided_slice %42 {offsets = [0, 1], sizes = [32, 255], strides = [1, 1]} : vector<32x256xf32> to vector<32x255xf32>
    %cst_16 = arith.constant 0.000000e+00 : f32
    %56 = vector.broadcast %cst_16 : f32 to vector<32x1xf32>
    %57 = tpu.concatenate %55, %56 in 1 : vector<32x255xf32>, vector<32x1xf32> -> vector<32x256xf32>
    %58 = vector.extract_strided_slice %40 {offsets = [0, 15], sizes = [32, 241], strides = [1, 1]} : vector<32x256xf32> to vector<32x241xf32>
    %cst_17 = arith.constant 0.000000e+00 : f32
    %59 = vector.broadcast %cst_17 : f32 to vector<32x15xf32>
    %60 = tpu.concatenate %58, %59 in 1 : vector<32x241xf32>, vector<32x15xf32> -> vector<32x256xf32>
    %61 = vector.extract_strided_slice %38 {offsets = [0, 16], sizes = [32, 240], strides = [1, 1]} : vector<32x256xf32> to vector<32x240xf32>
    %cst_18 = arith.constant 0.000000e+00 : f32
    %62 = vector.broadcast %cst_18 : f32 to vector<32x16xf32>
    %63 = tpu.concatenate %61, %62 in 1 : vector<32x240xf32>, vector<32x16xf32> -> vector<32x256xf32>
    %64 = vector.extract_strided_slice %42 {offsets = [0, 17], sizes = [32, 239], strides = [1, 1]} : vector<32x256xf32> to vector<32x239xf32>
    %cst_19 = arith.constant 0.000000e+00 : f32
    %65 = vector.broadcast %cst_19 : f32 to vector<32x17xf32>
    %66 = tpu.concatenate %64, %65 in 1 : vector<32x239xf32>, vector<32x17xf32> -> vector<32x256xf32>
    %67 = tpu.concatenate %45, %48, %51, %54, %38, %57, %60, %63, %66 in 0 : vector<32x256xf32>, vector<32x256xf32>, vector<32x256xf32>, vector<32x256xf32>, vector<32x256xf32>, vector<32x256xf32>, vector<32x256xf32>, vector<32x256xf32>, vector<32x256xf32> -> vector<288x256xf32>
    %cst_20 = arith.constant dense<0.000000e+00> : vector<8x256xf32>
    %68 = tpu.matmul %6, %67, %cst_20 {dimension_numbers = #tpu.dot_dimension_numbers<[1], [0], [0], [1], [0, 0, 1, 1], [], []>} : vector<8x288xf32>, vector<288x256xf32>, vector<8x256xf32> -> vector<8x256xf32>
    %69 = arith.index_cast %c0_i32_9 : i32 to index
    %c0_21 = arith.constant 0 : index
    %c0_22 = arith.constant 0 : index
    %70 = vector.load %arg6[%69, %c0_21, %c0_22] : memref<1x12x256xf32, #tpu.memory_space<vmem>>, vector<1x8x256xf32>
    %71 = vector.shape_cast %70 : vector<1x8x256xf32> to vector<8x256xf32>
    %72 = vector.shape_cast %68 : vector<8x256xf32> to vector<1x8x256xf32>
    tpu.vector_store %arg6[%69, %c0_21, %c0_22], %72 {strides = array<i32>} : memref<1x12x256xf32, #tpu.memory_space<vmem>>, vector<1x8x256xf32>,
    %73 = arith.index_cast %c0_i32_9 : i32 to index
    %c0_23 = arith.constant 0 : index
    %c0_24 = arith.constant 0 : index
    %74 = vector.load %arg5[%73, %c0_23, %c0_24] : memref<1x4x256xf32, #tpu.memory_space<vmem>>, vector<1x4x256xf32>
    %75 = vector.shape_cast %74 : vector<1x4x256xf32> to vector<4x256xf32>
    %76 = arith.index_cast %c0_i32_9 : i32 to index
    %c8 = arith.constant 8 : index
    %c0_25 = arith.constant 0 : index
    %77 = vector.load %arg6[%76, %c8, %c0_25] : memref<1x12x256xf32, #tpu.memory_space<vmem>>, vector<1x4x256xf32>
    %78 = vector.shape_cast %77 : vector<1x4x256xf32> to vector<4x256xf32>
    %79 = vector.shape_cast %75 : vector<4x256xf32> to vector<1x4x256xf32>
    tpu.vector_store %arg6[%76, %c8, %c0_25], %79 {strides = array<i32>} : memref<1x12x256xf32, #tpu.memory_space<vmem>>, vector<1x4x256xf32>,
    %c1_i32_26 = arith.constant 1 : i32
    return
  }
  func.func @transform_0(%arg0: i32) -> (i32, i32, i32) {
    %c0_i32 = arith.constant 0 : i32
    %c0_i32_0 = arith.constant 0 : i32
    %c0_i32_1 = arith.constant 0 : i32
    return %arg0, %c0_i32, %c0_i32_0 : i32, i32, i32
  }
  func.func @transform_1(%arg0: i32) -> (i32, i32) {
    %c0_i32 = arith.constant 0 : i32
    %c0_i32_0 = arith.constant 0 : i32
    %c0_i32_1 = arith.constant 0 : i32
    return %c0_i32, %c0_i32_0 : i32, i32
  }
  func.func @transform_2(%arg0: i32) -> (i32, i32) {
    %c0_i32 = arith.constant 0 : i32
    %c0_i32_0 = arith.constant 0 : i32
    %c0_i32_1 = arith.constant 0 : i32
    return %c0_i32, %c0_i32_0 : i32, i32
  }
  func.func @transform_3(%arg0: i32) -> (i32, i32) {
    %c0_i32 = arith.constant 0 : i32
    %c0_i32_0 = arith.constant 0 : i32
    %c0_i32_1 = arith.constant 0 : i32
    return %c0_i32, %c0_i32_0 : i32, i32
  }
  func.func @transform_4(%arg0: i32) -> (i32, i32, i32) {
    %c0_i32 = arith.constant 0 : i32
    %c0_i32_0 = arith.constant 0 : i32
    %c0_i32_1 = arith.constant 0 : i32
    return %arg0, %c0_i32, %c0_i32_0 : i32, i32, i32
  }
  func.func @transform_5(%arg0: i32) -> (i32, i32, i32) {
    %c0_i32 = arith.constant 0 : i32
    %c0_i32_0 = arith.constant 0 : i32
    %c0_i32_1 = arith.constant 0 : i32
    return %arg0, %c0_i32, %c0_i32_0 : i32, i32, i32
  }
}

</mosaic_0001>

<llo_original>
// kernel: bottleneck_forward.3
$region0: #{bottleneck_forward.3}
  #allocation0 [shape = 'u32[]', space=smem, size = 0x4, offset = 0x4, fixed_abs, tag = 'smem constant byte address 0x4 - core index']
  #allocation1 [shape = 'u32[144,128]{1,0:T(1,128)}', space=vmem, size = 0x12000, scoped, tag = 'internal scratch']
  %s0 = inlined_call_operand.vmem [shape: f32[2,32,256], index: 0, kind: input, shape index: {}]
  %s1 = inlined_call_operand.vmem [shape: f32[32,1], index: 1, kind: input, shape index: {}]
  %s2 = inlined_call_operand.vmem [shape: f32[32,1], index: 2, kind: input, shape index: {}]
  %s3 = inlined_call_operand.vmem [shape: f32[8,288], index: 3, kind: input, shape index: {}]
  %s4 = inlined_call_operand.vmem [shape: f32[2,4,256], index: 4, kind: input, shape index: {}]
  %s5 = inlined_call_operand.vmem [shape: f32[2,12,256], index: 5, kind: output, shape index: {}]
  %s6 = sld [smem:[#allocation0]]
  $region53: #{bottleneck_forward.3} parent=0
    _
  %s8 = ssub.s32 1, %s6
  %s9 = scalar_select 0, %s8, %s6
  loop: start=0, step=1, limit=4
  $region2: #{bottleneck_forward.3} parent=0 // loop_pre_header
    _
  $region3: #{bottleneck_forward.3} parent=0 // loop_header
    %s11 = sphi 0, %s15
    %p12 = scmp.ge.s32.totalorder %s11, 4
    %s21 = sphi 0, %s23
    %s24 = sphi 0, %s21
    %s25 = sphi 0, %s24
    %s41 = sphi 0, %s25
    %s45 = sphi 0, %s45
    %s47 = sphi 0, %s45
    %s48 = sphi 0, %s47
    %s62 = sphi 0, %s48
    %s66 = sphi 0, %s66
    %s68 = sphi 0, %s66
    %s69 = sphi 0, %s68
    %s83 = sphi 0, %s69
    %s87 = sphi 0, %s87
    %s89 = sphi 0, %s87
    %s90 = sphi 0, %s89
    %s104 = sphi 0, %s90
    %s110 = sphi 0, %s112
    %s113 = sphi 0, %s110
    %s114 = sphi 0, %s113
    %s130 = sphi 0, %s114
    %s136 = sphi 0, %s138
    %s139 = sphi 0, %s136
    %s140 = sphi 0, %s139
    %s156 = sphi 0, %s140
  $region4: #{bottleneck_forward.3} parent=0 // loop_header_branch
    %14 = sbr.rel (%p12) target = $region8
  $region5: #{bottleneck_forward.3} parent=0 // loop_body
    %s16 = ssub.s32 %s11, 1
    %s17 = ssub.s32 %s11, 2
    %s18 = sadd.s32 %s11, 1
    %s19 = ssub.s32 %s11, %s18
    %p20 = scmp.eq.s32.totalorder %s19, 0
    %s22 = sadd.s32 %s21, 1
    %s23 = scalar_select %p20, %s21, %s22
    %p26 = pneg %p20
    %p27 = scmp.eq.s32.totalorder %s11, 1
    %p28 = por %p26, %p27
    %p29 = scmp.ne.s32.totalorder %s21, %s24
    %p30 = scmp.eq.s32.totalorder %s11, 0
    %p31 = por %p29, %p30
    %p32 = scmp.ne.s32.totalorder %s21, %s24
    %p33 = scmp.eq.s32.totalorder %s16, 1
    %p34 = por %p32, %p33
    %p35 = scmp.ne.s32.totalorder %s24, %s25
    %p36 = scmp.eq.s32.totalorder %s16, 0
    %p37 = por %p35, %p36
    %p38 = scmp.ne.s32.totalorder %s24, %s25
    %p39 = scmp.eq.s32.totalorder %s17, 1
    %p40 = por %p38, %p39
    %p42 = scmp.ne.s32.totalorder %s25, %s41
    %p43 = scmp.eq.s32.totalorder %s17, 0
    %p44 = por %p42, %p43
    %s46 = sadd.s32 %s45, 1
    %p49 = scmp.eq.s32.totalorder %s11, 1
    %p50 = scmp.ne.s32.totalorder %s45, %s47
    %p51 = scmp.eq.s32.totalorder %s11, 0
    %p52 = por %p50, %p51
    %p53 = scmp.ne.s32.totalorder %s45, %s47
    %p54 = scmp.eq.s32.totalorder %s16, 1
    %p55 = por %p53, %p54
    %p56 = scmp.ne.s32.totalorder %s47, %s48
    %p57 = scmp.eq.s32.totalorder %s16, 0
    %p58 = por %p56, %p57
    %p59 = scmp.ne.s32.totalorder %s47, %s48
    %p60 = scmp.eq.s32.totalorder %s17, 1
    %p61 = por %p59, %p60
    %p63 = scmp.ne.s32.totalorder %s48, %s62
    %p64 = scmp.eq.s32.totalorder %s17, 0
    %p65 = por %p63, %p64
    %s67 = sadd.s32 %s66, 1
    %p70 = scmp.eq.s32.totalorder %s11, 1
    %p71 = scmp.ne.s32.totalorder %s66, %s68
    %p72 = scmp.eq.s32.totalorder %s11, 0
    %p73 = por %p71, %p72
    %p74 = scmp.ne.s32.totalorder %s66, %s68
    %p75 = scmp.eq.s32.totalorder %s16, 1
    %p76 = por %p74, %p75
    %p77 = scmp.ne.s32.totalorder %s68, %s69
    %p78 = scmp.eq.s32.totalorder %s16, 0
    %p79 = por %p77, %p78
    %p80 = scmp.ne.s32.totalorder %s68, %s69
    %p81 = scmp.eq.s32.totalorder %s17, 1
    %p82 = por %p80, %p81
    %p84 = scmp.ne.s32.totalorder %s69, %s83
    %p85 = scmp.eq.s32.totalorder %s17, 0
    %p86 = por %p84, %p85
    %s88 = sadd.s32 %s87, 1
    %p91 = scmp.eq.s32.totalorder %s11, 1
    %p92 = scmp.ne.s32.totalorder %s87, %s89
    %p93 = scmp.eq.s32.totalorder %s11, 0
    %p94 = por %p92, %p93
    %p95 = scmp.ne.s32.totalorder %s87, %s89
    %p96 = scmp.eq.s32.totalorder %s16, 1
    %p97 = por %p95, %p96
    %p98 = scmp.ne.s32.totalorder %s89, %s90
    %p99 = scmp.eq.s32.totalorder %s16, 0
    %p100 = por %p98, %p99
    %p101 = scmp.ne.s32.totalorder %s89, %s90
    %p102 = scmp.eq.s32.totalorder %s17, 1
    %p103 = por %p101, %p102
    %p105 = scmp.ne.s32.totalorder %s90, %s104
    %p106 = scmp.eq.s32.totalorder %s17, 0
    %p107 = por %p105, %p106
    %s108 = ssub.s32 %s11, %s18
    %p109 = scmp.eq.s32.totalorder %s108, 0
    %s111 = sadd.s32 %s110, 1
    %s112 = scalar_select %p109, %s110, %s111
    %p115 = pneg %p109
    %p116 = scmp.eq.s32.totalorder %s11, 1
    %p117 = por %p115, %p116
    %p118 = scmp.ne.s32.totalorder %s110, %s113
    %p119 = scmp.eq.s32.totalorder %s11, 0
    %p120 = por %p118, %p119
    %p121 = scmp.ne.s32.totalorder %s110, %s113
    %p122 = scmp.eq.s32.totalorder %s16, 1
    %p123 = por %p121, %p122
    %p124 = scmp.ne.s32.totalorder %s113, %s114
    %p125 = scmp.eq.s32.totalorder %s16, 0
    %p126 = por %p124, %p125
    %p127 = scmp.ne.s32.totalorder %s113, %s114
    %p128 = scmp.eq.s32.totalorder %s17, 1
    %p129 = por %p127, %p128
    %p131 = scmp.ne.s32.totalorder %s114, %s130
    %p132 = scmp.eq.s32.totalorder %s17, 0
    %p133 = por %p131, %p132
    %s134 = ssub.s32 %s11, %s18
    %p135 = scmp.eq.s32.totalorder %s134, 0
    %s137 = sadd.s32 %s136, 1
    %s138 = scalar_select %p135, %s136, %s137
    %p141 = pneg %p135
    %p142 = scmp.eq.s32.totalorder %s11, 1
    %p143 = por %p141, %p142
    %p144 = scmp.ne.s32.totalorder %s136, %s139
    %p145 = scmp.eq.s32.totalorder %s11, 0
    %p146 = por %p144, %p145
    %p147 = scmp.ne.s32.totalorder %s136, %s139
    %p148 = scmp.eq.s32.totalorder %s16, 1
    %p149 = por %p147, %p148
    %p150 = scmp.ne.s32.totalorder %s139, %s140
    %p151 = scmp.eq.s32.totalorder %s16, 0
    %p152 = por %p150, %p151
    %p153 = scmp.ne.s32.totalorder %s139, %s140
    %p154 = scmp.eq.s32.totalorder %s17, 1
    %p155 = por %p153, %p154
    %p157 = scmp.ne.s32.totalorder %s140, %s156
    %p158 = scmp.eq.s32.totalorder %s17, 0
    %p159 = por %p157, %p158
    %p160 = scmp.le.s32.totalorder 1, %s11
    %p161 = scmp.lt.s32.totalorder %s11, 3
    %p162 = pnand %p160, %p161
    %p163 = pneg %p162
    // Predicated region
    $region9: #{bottleneck_forward.3} parent=5 // pred_check
      _
    $region10: #{bottleneck_forward.3} parent=5 // pred_check_branch
      %165 = sbr.rel (%p162) target = $region12
    $region11: #{bottleneck_forward.3} parent=5 // pred_region
      %s166 = ssub.s32 %s11, 1
      // Predicated region
      $region13: #{bottleneck_forward.3} parent=11 // pred_check
        %p167 = pneg %p58
      $region14: #{bottleneck_forward.3} parent=11 // pred_check_branch
        %169 = sbr.rel (%p167) target = $region16
      $region15: #{bottleneck_forward.3} parent=11 // pred_region
        _
      $region16: #{bottleneck_forward.3} parent=11 // pred_fallthru
        _
      // Predicated region
      $region17: #{bottleneck_forward.3} parent=11 // pred_check
        %p170 = pneg %p79
      $region18: #{bottleneck_forward.3} parent=11 // pred_check_branch
        %172 = sbr.rel (%p170) target = $region20
      $region19: #{bottleneck_forward.3} parent=11 // pred_region
        _
      $region20: #{bottleneck_forward.3} parent=11 // pred_fallthru
        _
      // Predicated region
      $region21: #{bottleneck_forward.3} parent=11 // pred_check
        %p173 = pneg %p100
      $region22: #{bottleneck_forward.3} parent=11 // pred_check_branch
        %175 = sbr.rel (%p173) target = $region24
      $region23: #{bottleneck_forward.3} parent=11 // pred_region
        _
      $region24: #{bottleneck_forward.3} parent=11 // pred_fallthru
        _
    $region12: #{bottleneck_forward.3} parent=5 // pred_fallthru
      _
    %p176 = scmp.lt.s32.totalorder %s11, 2
    // Predicated region
    $region25: #{bottleneck_forward.3} parent=5 // pred_check
      %p177 = pneg %p176
    $region26: #{bottleneck_forward.3} parent=5 // pred_check_branch
      %179 = sbr.rel (%p177) target = $region28
    $region27: #{bottleneck_forward.3} parent=5 // pred_region
      // Predicated region
      $region29: #{bottleneck_forward.3} parent=27 // pred_check
        %p180 = pneg %p31
      $region30: #{bottleneck_forward.3} parent=27 // pred_check_branch
        %182 = sbr.rel (%p180) target = $region32
      $region31: #{bottleneck_forward.3} parent=27 // pred_region
        %p183 = scmp.lt.s32.totalorder %s11, 1
        %s184 = scalar_select %p183, %s11, 1
        %s185 = smul.addr %s184, 8
        %s186 = smul.addr %s185, 8
        %s187 = scalar_lea.vmem %s0, %s186
      $region32: #{bottleneck_forward.3} parent=27 // pred_fallthru
        _
      // Predicated region
      $region33: #{bottleneck_forward.3} parent=27 // pred_check
        %p188 = pneg %p120
      $region34: #{bottleneck_forward.3} parent=27 // pred_check_branch
        %190 = sbr.rel (%p188) target = $region36
      $region35: #{bottleneck_forward.3} parent=27 // pred_region
        %p191 = scmp.lt.s32.totalorder %s11, 1
        %s192 = scalar_select %p191, %s11, 1
        %s193 = smul.addr %s192, 2
        %s194 = smul.addr %s193, 4
        %s195 = scalar_lea.vmem %s4, %s194
      $region36: #{bottleneck_forward.3} parent=27 // pred_fallthru
        _
    $region28: #{bottleneck_forward.3} parent=5 // pred_fallthru
      _
    %p196 = scmp.le.s32.totalorder 1, %s11
    %p197 = scmp.lt.s32.totalorder %s11, 3
    %p198 = pnand %p196, %p197
    %p199 = pneg %p198
    // Predicated region
    $region37: #{bottleneck_forward.3} parent=5 // pred_check
      _
    $region38: #{bottleneck_forward.3} parent=5 // pred_check_branch
      %201 = sbr.rel (%p198) target = $region40
    $region39: #{bottleneck_forward.3} parent=5 // pred_region
      %s202 = ssub.s32 %s11, 1
      %p203 = scmp.lt.s32.totalorder %s16, 1
      %s204 = scalar_select %p203, %s16, 1
      %s205 = smul.addr %s204, 8
      %s206 = smul.addr %s205, 8
      %s207 = scalar_lea.vmem %s0, %s206
      %p208 = pneg %p37
      %p209 = pneg %p34
      %p210 = pneg %p58
      %p211 = pneg %p55
      %p212 = pneg %p79
      %p213 = pneg %p76
      %p214 = pneg %p100
      %p215 = pneg %p97
      %p216 = scmp.lt.s32.totalorder %s16, 1
      %s217 = scalar_select %p216, %s16, 1
      %s218 = smul.addr %s217, 2
      %s219 = smul.addr %s218, 4
      %s220 = scalar_lea.vmem %s4, %s219
      %p221 = pneg %p126
      %p222 = pneg %p123
      %p223 = pneg %p152
      %p224 = pneg %p149
      %p225 = scmp.lt.s32.totalorder %s16, 1
      %s226 = scalar_select %p225, %s16, 1
      %s227 = smul.addr %s226, 4
      %s228 = smul.addr %s227, 8
      %s229 = scalar_lea.vmem %s5, %s228
      %p230 = scmp.lt.s32.totalorder %s16, 1
      %s231 = scalar_select %p230, %s16, 1
      %s232 = smul.addr %s231, 8
      %s233 = smul.addr %s232, 8
      %s234 = scalar_lea.vmem %s0, %s233
      %p235 = scmp.lt.s32.totalorder %s16, 1
      %s236 = scalar_select %p235, %s16, 1
      %s237 = smul.addr %s236, 2
      %s238 = smul.addr %s237, 4
      %s239 = scalar_lea.vmem %s4, %s238
      %p240 = scmp.lt.s32.totalorder %s16, 1
      %s241 = scalar_select %p240, %s16, 1
      %s242 = smul.addr %s241, 4
      %s243 = smul.addr %s242, 8
      %s244 = scalar_lea.vmem %s5, %s243
      %v245 = vld [vmem:[%s1] sm:$0xff]
      %v246 = vld [vmem:[%s1 + $0x8] sm:$0xff]
      %v247 = vld [vmem:[%s1 + $0x10] sm:$0xff]
      %v248 = vld [vmem:[%s1 + $0x18] sm:$0xff]
      %250 = vset.pattern.permute.xlu0 0
      %251 = vperm.xlu0 %250, %v245
      %v252 = vpop.permute.xlu0 %251
      %255 = vset.pattern.permute.xlu0 0
      %256 = vperm.xlu0 %255, %v246
      %v257 = vpop.permute.xlu0 %256
      %260 = vset.pattern.permute.xlu0 0
      %261 = vperm.xlu0 %260, %v247
      %v262 = vpop.permute.xlu0 %261
      %265 = vset.pattern.permute.xlu0 0
      %266 = vperm.xlu0 %265, %v248
      %v267 = vpop.permute.xlu0 %266
      %v269 = vld [vmem:[%s2] sm:$0xff]
      %v270 = vld [vmem:[%s2 + $0x8] sm:$0xff]
      %v271 = vld [vmem:[%s2 + $0x10] sm:$0xff]
      %v272 = vld [vmem:[%s2 + $0x18] sm:$0xff]
      %274 = vset.pattern.permute.xlu0 0
      %275 = vperm.xlu0 %274, %v269
      %v276 = vpop.permute.xlu0 %275
      %279 = vset.pattern.permute.xlu0 0
      %280 = vperm.xlu0 %279, %v270
      %v281 = vpop.permute.xlu0 %280
      %284 = vset.pattern.permute.xlu0 0
      %285 = vperm.xlu0 %284, %v271
      %v286 = vpop.permute.xlu0 %285
      %289 = vset.pattern.permute.xlu0 0
      %290 = vperm.xlu0 %289, %v272
      %v291 = vpop.permute.xlu0 %290
      %v293 = vld [vmem:[%s3] sm:$0xff]
      %v294 = vld [vmem:[%s3 + $0x8] sm:$0xff]
      %v295 = vld [vmem:[%s3 + $0x10] sm:$0xff]
      %v296 = vlaneseq
      %v297 = vand.u32 %v296, 127
      %v298 = vadd.s32 %v297, 128
      %vm299 = vcmp.lt.s32.totalorder %v297, 0
      %v300 = vsub.s32 0, %v297
      %v301 = vsel %vm299, %v300, %v297
      %v302 = vshrl.u32 %v301, 4
      %v303 = vand.u32 %v301, 15
      %v304 = vsub.s32 0, %v303
      %v305 = vsel %vm299, %v304, %v303
      %vm306 = vcmp.lt.s32.totalorder %v298, 0
      %v307 = vsub.s32 0, %v298
      %v308 = vsel %vm306, %v307, %v298
      %v309 = vshrl.u32 %v308, 4
      %v310 = vand.u32 %v308, 15
      %v311 = vsub.s32 0, %v310
      %v312 = vsel %vm306, %v311, %v310
      %vm313 = vcmp.ne.s32.totalorder %v305, 0
      %vm314 = vcmp.ne.s32.totalorder %v312, 0
      %vm315 = vcmp.lt.s32.totalorder %v305, 0
      %vm316 = vcmp.lt.s32.totalorder %v312, 0
      %vm317 = vmand %vm315, %vm313
      %vm318 = vmand %vm316, %vm314
      %v319 = vadd.s32 %v305, 16
      %v320 = vadd.s32 %v312, 16
      %v321 = vsel %vm317, %v319, %v305
      %v322 = vsel %vm318, %v320, %v312
      %vm323 = vcmp.ne.s32.totalorder %v321, 15
      %vm324 = vcmp.ne.s32.totalorder %v322, 15
      %v325 = vsel %vm323, 1, 0
      %v326 = vsel %vm324, 1, 0
      %v327 = vcvt.s32.f32 %v325
      %v328 = vcvt.s32.f32 %v326
      %vm329 = vcmp.ne.s32.totalorder %v321, 0
      %vm330 = vcmp.ne.s32.totalorder %v322, 0
      %v331 = vsel %vm329, 1, 0
      %v332 = vsel %vm330, 1, 0
      %v333 = vcvt.s32.f32 %v331
      %v334 = vcvt.s32.f32 %v332
      %v335 = vld [vmem:[%s234] sm:$0xff]
      %v336 = vld [vmem:[%s234 + $0x8] sm:$0xff]
      %v337 = vld [vmem:[%s234 + $0x10] sm:$0xff]
      %v338 = vld [vmem:[%s234 + $0x18] sm:$0xff]
      %v339 = vld [vmem:[%s234 + $0x20] sm:$0xff]
      %v340 = vld [vmem:[%s234 + $0x28] sm:$0xff]
      %v341 = vld [vmem:[%s234 + $0x30] sm:$0xff]
      %v342 = vld [vmem:[%s234 + $0x38] sm:$0xff]
      %v343 = vmul.f32 %v335, %v252
      %v344 = vmul.f32 %v336, %v252
      %v345 = vmul.f32 %v337, %v257
      %v346 = vmul.f32 %v338, %v257
      %v347 = vmul.f32 %v339, %v262
      %v348 = vmul.f32 %v340, %v262
      %v349 = vmul.f32 %v341, %v267
      %v350 = vmul.f32 %v342, %v267
      %v351 = vadd.f32 %v343, %v276
      %v352 = vadd.f32 %v344, %v276
      %v353 = vadd.f32 %v345, %v281
      %v354 = vadd.f32 %v346, %v281
      %v355 = vadd.f32 %v347, %v286
      %v356 = vadd.f32 %v348, %v286
      %v357 = vadd.f32 %v349, %v291
      %v358 = vadd.f32 %v350, %v291
      %v359 = vmax.f32 %v351, 0.0
      %v360 = vmax.f32 %v352, 0.0
      %v361 = vmax.f32 %v353, 0.0
      %v362 = vmax.f32 %v354, 0.0
      %v363 = vmax.f32 %v355, 0.0
      %v364 = vmax.f32 %v356, 0.0
      %v365 = vmax.f32 %v357, 0.0
      %v366 = vmax.f32 %v358, 0.0
      %v367 = vmul.f32 %v359, %v327
      %v368 = vmul.f32 %v360, %v328
      %v369 = vmul.f32 %v361, %v327
      %v370 = vmul.f32 %v362, %v328
      %v371 = vmul.f32 %v363, %v327
      %v372 = vmul.f32 %v364, %v328
      %v373 = vmul.f32 %v365, %v327
      %v374 = vmul.f32 %v366, %v328
      %v375 = vmul.f32 %v359, %v333
      %v376 = vmul.f32 %v360, %v334
      %v377 = vmul.f32 %v361, %v333
      %v378 = vmul.f32 %v362, %v334
      %v379 = vmul.f32 %v363, %v333
      %v380 = vmul.f32 %v364, %v334
      %v381 = vmul.f32 %v365, %v333
      %v382 = vmul.f32 %v366, %v334
      %391 = vrot.lane.b32.xlu0 %v367, 17
      %v392 = vpop.permute.xlu0 %391
      %393 = vrot.lane.b32.xlu0 %v368, 17
      %v394 = vpop.permute.xlu0 %393
      %395 = vrot.lane.b32.xlu0 %v369, 17
      %v396 = vpop.permute.xlu0 %395
      %397 = vrot.lane.b32.xlu0 %v370, 17
      %v398 = vpop.permute.xlu0 %397
      %399 = vrot.lane.b32.xlu0 %v371, 17
      %v400 = vpop.permute.xlu0 %399
      %401 = vrot.lane.b32.xlu0 %v372, 17
      %v402 = vpop.permute.xlu0 %401
      %403 = vrot.lane.b32.xlu0 %v373, 17
      %v404 = vpop.permute.xlu0 %403
      %405 = vrot.lane.b32.xlu0 %v374, 17
      %v406 = vpop.permute.xlu0 %405
      %vm407 = vcmask 138240
      %v408 = vsel %vm407, %v392, %v394
      %v409 = vsel %vm407, %v396, %v398
      %v410 = vsel %vm407, %v400, %v402
      %v411 = vsel %vm407, %v404, %v406
      %v420 = vsel %vm407, 0.0, %v392
      %v421 = vsel %vm407, 0.0, %v396
      %v422 = vsel %vm407, 0.0, %v400
      %v423 = vsel %vm407, 0.0, %v404
      %432 = vrot.lane.b32.xlu0 %v359, 16
      %v433 = vpop.permute.xlu0 %432
      %434 = vrot.lane.b32.xlu0 %v360, 16
      %v435 = vpop.permute.xlu0 %434
      %436 = vrot.lane.b32.xlu0 %v361, 16
      %v437 = vpop.permute.xlu0 %436
      %438 = vrot.lane.b32.xlu0 %v362, 16
      %v439 = vpop.permute.xlu0 %438
      %440 = vrot.lane.b32.xlu0 %v363, 16
      %v441 = vpop.permute.xlu0 %440
      %442 = vrot.lane.b32.xlu0 %v364, 16
      %v443 = vpop.permute.xlu0 %442
      %444 = vrot.lane.b32.xlu0 %v365, 16
      %v445 = vpop.permute.xlu0 %444
      %446 = vrot.lane.b32.xlu0 %v366, 16
      %v447 = vpop.permute.xlu0 %446
      %vm448 = vcmask 130048
      %v449 = vsel %vm448, %v433, %v435
      %v450 = vsel %vm448, %v437, %v439
      %v451 = vsel %vm448, %v441, %v443
      %v452 = vsel %vm448, %v445, %v447
      %v461 = vsel %vm448, 0.0, %v433
      %v462 = vsel %vm448, 0.0, %v437
      %v463 = vsel %vm448, 0.0, %v441
      %v464 = vsel %vm448, 0.0, %v445
      %473 = vrot.lane.b32.xlu0 %v375, 15
      %v474 = vpop.permute.xlu0 %473
      %475 = vrot.lane.b32.xlu0 %v376, 15
      %v476 = vpop.permute.xlu0 %475
      %477 = vrot.lane.b32.xlu0 %v377, 15
      %v478 = vpop.permute.xlu0 %477
      %479 = vrot.lane.b32.xlu0 %v378, 15
      %v480 = vpop.permute.xlu0 %479
      %481 = vrot.lane.b32.xlu0 %v379, 15
      %v482 = vpop.permute.xlu0 %481
      %483 = vrot.lane.b32.xlu0 %v380, 15
      %v484 = vpop.permute.xlu0 %483
      %485 = vrot.lane.b32.xlu0 %v381, 15
      %v486 = vpop.permute.xlu0 %485
      %487 = vrot.lane.b32.xlu0 %v382, 15
      %v488 = vpop.permute.xlu0 %487
      %vm489 = vcmask 121856
      %v490 = vsel %vm489, %v474, %v476
      %v491 = vsel %vm489, %v478, %v480
      %v492 = vsel %vm489, %v482, %v484
      %v493 = vsel %vm489, %v486, %v488
      %v502 = vsel %vm489, 0.0, %v474
      %v503 = vsel %vm489, 0.0, %v478
      %v504 = vsel %vm489, 0.0, %v482
      %v505 = vsel %vm489, 0.0, %v486
      %506 = vrot.lane.b32.xlu0 %v367, 1
      %v507 = vpop.permute.xlu0 %506
      %508 = vrot.lane.b32.xlu0 %v368, 1
      %v509 = vpop.permute.xlu0 %508
      %510 = vrot.lane.b32.xlu0 %v369, 1
      %v511 = vpop.permute.xlu0 %510
      %512 = vrot.lane.b32.xlu0 %v370, 1
      %v513 = vpop.permute.xlu0 %512
      %514 = vrot.lane.b32.xlu0 %v371, 1
      %v515 = vpop.permute.xlu0 %514
      %516 = vrot.lane.b32.xlu0 %v372, 1
      %v517 = vpop.permute.xlu0 %516
      %518 = vrot.lane.b32.xlu0 %v373, 1
      %v519 = vpop.permute.xlu0 %518
      %520 = vrot.lane.b32.xlu0 %v374, 1
      %v521 = vpop.permute.xlu0 %520
      %vm522 = vcmask 7168
      %v523 = vsel %vm522, %v507, %v509
      %v524 = vsel %vm522, %v511, %v513
      %v525 = vsel %vm522, %v515, %v517
      %v526 = vsel %vm522, %v519, %v521
      %v535 = vsel %vm522, 0.0, %v507
      %v536 = vsel %vm522, 0.0, %v511
      %v537 = vsel %vm522, 0.0, %v515
      %v538 = vsel %vm522, 0.0, %v519
      %539 = vrot.lane.b32.xlu0 %v375, 127
      %v540 = vpop.permute.xlu0 %539
      %541 = vrot.lane.b32.xlu0 %v376, 127
      %v542 = vpop.permute.xlu0 %541
      %543 = vrot.lane.b32.xlu0 %v377, 127
      %v544 = vpop.permute.xlu0 %543
      %545 = vrot.lane.b32.xlu0 %v378, 127
      %v546 = vpop.permute.xlu0 %545
      %547 = vrot.lane.b32.xlu0 %v379, 127
      %v548 = vpop.permute.xlu0 %547
      %549 = vrot.lane.b32.xlu0 %v380, 127
      %v550 = vpop.permute.xlu0 %549
      %551 = vrot.lane.b32.xlu0 %v381, 127
      %v552 = vpop.permute.xlu0 %551
      %553 = vrot.lane.b32.xlu0 %v382, 127
      %v554 = vpop.permute.xlu0 %553
      %vm555 = vcmask 1039360
      %v556 = vsel %vm555, %v540, %v542
      %v557 = vsel %vm555, %v544, %v546
      %v558 = vsel %vm555, %v548, %v550
      %v559 = vsel %vm555, %v552, %v554
      %v568 = vsel %vm555, %v542, 0.0
      %v569 = vsel %vm555, %v546, 0.0
      %v570 = vsel %vm555, %v550, 0.0
      %v571 = vsel %vm555, %v554, 0.0
      %572 = vrot.lane.b32.xlu0 %v367, 113
      %v573 = vpop.permute.xlu0 %572
      %574 = vrot.lane.b32.xlu0 %v368, 113
      %v575 = vpop.permute.xlu0 %574
      %576 = vrot.lane.b32.xlu0 %v369, 113
      %v577 = vpop.permute.xlu0 %576
      %578 = vrot.lane.b32.xlu0 %v370, 113
      %v579 = vpop.permute.xlu0 %578
      %580 = vrot.lane.b32.xlu0 %v371, 113
      %v581 = vpop.permute.xlu0 %580
      %582 = vrot.lane.b32.xlu0 %v372, 113
      %v583 = vpop.permute.xlu0 %582
      %584 = vrot.lane.b32.xlu0 %v373, 113
      %v585 = vpop.permute.xlu0 %584
      %586 = vrot.lane.b32.xlu0 %v374, 113
      %v587 = vpop.permute.xlu0 %586
      %vm588 = vcmask 924672
      %v589 = vsel %vm588, %v573, %v575
      %v590 = vsel %vm588, %v577, %v579
      %v591 = vsel %vm588, %v581, %v583
      %v592 = vsel %vm588, %v585, %v587
      %v601 = vsel %vm588, %v575, 0.0
      %v602 = vsel %vm588, %v579, 0.0
      %v603 = vsel %vm588, %v583, 0.0
      %v604 = vsel %vm588, %v587, 0.0
      %605 = vrot.lane.b32.xlu0 %v359, 112
      %v606 = vpop.permute.xlu0 %605
      %607 = vrot.lane.b32.xlu0 %v360, 112
      %v608 = vpop.permute.xlu0 %607
      %609 = vrot.lane.b32.xlu0 %v361, 112
      %v610 = vpop.permute.xlu0 %609
      %611 = vrot.lane.b32.xlu0 %v362, 112
      %v612 = vpop.permute.xlu0 %611
      %613 = vrot.lane.b32.xlu0 %v363, 112
      %v614 = vpop.permute.xlu0 %613
      %615 = vrot.lane.b32.xlu0 %v364, 112
      %v616 = vpop.permute.xlu0 %615
      %617 = vrot.lane.b32.xlu0 %v365, 112
      %v618 = vpop.permute.xlu0 %617
      %619 = vrot.lane.b32.xlu0 %v366, 112
      %v620 = vpop.permute.xlu0 %619
      %vm621 = vcmask 916480
      %v622 = vsel %vm621, %v606, %v608
      %v623 = vsel %vm621, %v610, %v612
      %v624 = vsel %vm621, %v614, %v616
      %v625 = vsel %vm621, %v618, %v620
      %v634 = vsel %vm621, %v608, 0.0
      %v635 = vsel %vm621, %v612, 0.0
      %v636 = vsel %vm621, %v616, 0.0
      %v637 = vsel %vm621, %v620, 0.0
      %638 = vrot.lane.b32.xlu0 %v375, 111
      %v639 = vpop.permute.xlu0 %638
      %640 = vrot.lane.b32.xlu0 %v376, 111
      %v641 = vpop.permute.xlu0 %640
      %642 = vrot.lane.b32.xlu0 %v377, 111
      %v643 = vpop.permute.xlu0 %642
      %644 = vrot.lane.b32.xlu0 %v378, 111
      %v645 = vpop.permute.xlu0 %644
      %646 = vrot.lane.b32.xlu0 %v379, 111
      %v647 = vpop.permute.xlu0 %646
      %648 = vrot.lane.b32.xlu0 %v380, 111
      %v649 = vpop.permute.xlu0 %648
      %650 = vrot.lane.b32.xlu0 %v381, 111
      %v651 = vpop.permute.xlu0 %650
      %652 = vrot.lane.b32.xlu0 %v382, 111
      %v653 = vpop.permute.xlu0 %652
      %vm654 = vcmask 908288
      %v655 = vsel %vm654, %v639, %v641
      %v656 = vsel %vm654, %v643, %v645
      %v657 = vsel %vm654, %v647, %v649
      %v658 = vsel %vm654, %v651, %v653
      %v667 = vsel %vm654, %v641, 0.0
      %v668 = vsel %vm654, %v645, 0.0
      %v669 = vsel %vm654, %v649, 0.0
      %v670 = vsel %vm654, %v653, 0.0
      %vm671 = vcmask 261120
      %v673 = vsel %vm671, %v295, 0
      %675 = vmatprep.subr.mxu0 %v408
      %676 = vmatpush1.msra.mxu0 %v420
      %677 = vmatprep.subr.mxu0 %v409
      %678 = vmatpush1.msra.mxu0 %v421
      %679 = vmatprep.subr.mxu0 %v410
      %680 = vmatpush1.msra.mxu0 %v422
      %681 = vmatprep.subr.mxu0 %v411
      %682 = vmatpush1.msra.mxu0 %v423
      %683 = vmatprep.subr.mxu0 %v449
      %684 = vmatpush1.msra.mxu0 %v461
      %685 = vmatprep.subr.mxu0 %v450
      %686 = vmatpush1.msra.mxu0 %v462
      %687 = vmatprep.subr.mxu0 %v451
      %688 = vmatpush1.msra.mxu0 %v463
      %689 = vmatprep.subr.mxu0 %v452
      %690 = vmatpush1.msra.mxu0 %v464
      %691 = vmatprep.subr.mxu0 %v490
      %692 = vmatpush1.msra.mxu0 %v502
      %693 = vmatprep.subr.mxu0 %v491
      %694 = vmatpush1.msra.mxu0 %v503
      %695 = vmatprep.subr.mxu0 %v492
      %696 = vmatpush1.msra.mxu0 %v504
      %697 = vmatprep.subr.mxu0 %v493
      %698 = vmatpush1.msra.mxu0 %v505
      %699 = vmatprep.subr.mxu0 %v523
      %700 = vmatpush1.msra.mxu0 %v535
      %701 = vmatprep.subr.mxu0 %v524
      %702 = vmatpush1.msra.mxu0 %v536
      %703 = vmatprep.subr.mxu0 %v525
      %704 = vmatpush1.msra.mxu0 %v537
      %705 = vmatprep.subr.mxu0 %v526
      %706 = vmatpush1.msra.mxu0 %v538
      %707 = vmatprep.subr.mxu0 %v360
      %708 = vmatpush1.msra.mxu0 %v359
      %709 = vmatprep.subr.mxu0 %v362
      %710 = vmatpush1.msra.mxu0 %v361
      %711 = vmatprep.subr.mxu0 %v364
      %712 = vmatpush1.msra.mxu0 %v363
      %713 = vmatprep.subr.mxu0 %v366
      %714 = vmatpush1.msra.mxu0 %v365
      %715 = vmatprep.subr.mxu0 %v568
      %716 = vmatpush1.msra.mxu0 %v556
      %717 = vmatprep.subr.mxu0 %v569
      %718 = vmatpush1.msra.mxu0 %v557
      %719 = vmatprep.subr.mxu0 %v570
      %720 = vmatpush1.msra.mxu0 %v558
      %721 = vmatprep.subr.mxu0 %v571
      %722 = vmatpush1.msra.mxu0 %v559
      %723 = vmatprep.subr.mxu0 %v601
      %724 = vmatpush1.msra.mxu0 %v589
      %725 = vmatprep.subr.mxu0 %v602
      %726 = vmatpush1.msra.mxu0 %v590
      %727 = vmatprep.subr.mxu0 %v603
      %728 = vmatpush1.msra.mxu0 %v591
      %729 = vmatprep.subr.mxu0 %v604
      %730 = vmatpush1.msra.mxu0 %v592
      %731 = vmatprep.subr.mxu0 %v634
      %732 = vmatpush1.msra.mxu0 %v622
      %733 = vmatprep.subr.mxu0 %v635
      %734 = vmatpush1.msra.mxu0 %v623
      %735 = vmatprep.subr.mxu0 %v636
      %736 = vmatpush1.msra.mxu0 %v624
      %737 = vmatprep.subr.mxu0 %v637
      %738 = vmatpush1.msra.mxu0 %v625
      %739 = vmatprep.mubr.f32.mxu0 %v294
      %740 = vmatmul.mubr.f32.gmra.mrb[0].mxu0 %v293
      %v741 = vpop.f32.mrb[0].mxu0
      %v742 = vadd.f32 0.0, %v741
      %v743 = vpop.f32.mrb[0].mxu0
      %v744 = vadd.f32 0.0, %v743
      %745 = vdwg.mxu0
      %746 = vmatprep.subr.mxu0 %v667
      %747 = vmatpush1.msra.mxu0 %v655
      %748 = vmatprep.subr.mxu0 %v668
      %749 = vmatpush1.msra.mxu0 %v656
      %750 = vmatprep.subr.mxu0 %v669
      %751 = vmatpush1.msra.mxu0 %v657
      %752 = vmatprep.subr.mxu0 %v670
      %753 = vmatpush1.msra.mxu0 %v658
      %754 = vmatprep.subr.mxu0 0.0
      %755 = vmatpush1.msra.mxu0 0.0
      %756 = vmatprep.subr.mxu0 0.0
      %757 = vmatpush1.msra.mxu0 0.0
      %758 = vmatprep.subr.mxu0 0.0
      %759 = vmatpush1.msra.mxu0 0.0
      %760 = vmatprep.subr.mxu0 0.0
      %761 = vmatpush1.msra.mxu0 0.0
      %762 = vmatprep.subr.mxu0 0.0
      %763 = vmatpush1.msra.mxu0 0.0
      %764 = vmatprep.subr.mxu0 0.0
      %765 = vmatpush1.msra.mxu0 0.0
      %766 = vmatprep.subr.mxu0 0.0
      %767 = vmatpush1.msra.mxu0 0.0
      %768 = vmatprep.subr.mxu0 0.0
      %769 = vmatpush1.msra.mxu0 0.0
      %770 = vmatprep.subr.mxu0 0.0
      %771 = vmatpush1.msra.mxu0 0.0
      %772 = vmatprep.subr.mxu0 0.0
      %773 = vmatpush1.msra.mxu0 0.0
      %774 = vmatprep.subr.mxu0 0.0
      %775 = vmatpush1.msra.mxu0 0.0
      %776 = vmatprep.subr.mxu0 0.0
      %777 = vmatpush1.msra.mxu0 0.0
      %778 = vmatprep.subr.mxu0 0.0
      %779 = vmatpush1.msra.mxu0 0.0
      %780 = vmatprep.subr.mxu0 0.0
      %781 = vmatpush1.msra.mxu0 0.0
      %782 = vmatprep.subr.mxu0 0.0
      %783 = vmatpush1.msra.mxu0 0.0
      %784 = vmatprep.subr.mxu0 0.0
      %785 = vmatpush1.msra.mxu0 0.0
      %786 = vmatprep.subr.mxu0 0.0
      %787 = vmatpush1.msra.mxu0 0.0
      %788 = vmatprep.subr.mxu0 0.0
      %789 = vmatpush1.msra.mxu0 0.0
      %790 = vmatprep.subr.mxu0 0.0
      %791 = vmatpush1.msra.mxu0 0.0
      %792 = vmatprep.subr.mxu0 0.0
      %793 = vmatpush1.msra.mxu0 0.0
      %794 = vmatprep.subr.mxu0 0.0
      %795 = vmatpush1.msra.mxu0 0.0
      %796 = vmatprep.subr.mxu0 0.0
      %797 = vmatpush1.msra.mxu0 0.0
      %798 = vmatprep.subr.mxu0 0.0
      %799 = vmatpush1.msra.mxu0 0.0
      %800 = vmatprep.subr.mxu0 0.0
      %801 = vmatpush1.msra.mxu0 0.0
      %802 = vmatprep.subr.mxu0 0.0
      %803 = vmatpush1.msra.mxu0 0.0
      %804 = vmatprep.subr.mxu0 0.0
      %805 = vmatpush1.msra.mxu0 0.0
      %806 = vmatprep.subr.mxu0 0.0
      %807 = vmatpush1.msra.mxu0 0.0
      %808 = vmatprep.subr.mxu0 0.0
      %809 = vmatpush1.msra.mxu0 0.0
      %810 = vmatprep.mubr.f32.mxu0 0.0
      %811 = vmatmul.mubr.f32.gmra.mrb[0].mxu0 %v673
      %v812 = vpop.f32.mrb[0].mxu0
      %v813 = vadd.f32 %v742, %v812
      %v814 = vpop.f32.mrb[0].mxu0
      %v815 = vadd.f32 %v744, %v814
      %816 = vdwg.mxu0
      %817 = vst [vmem:[%s244] sm:$0xff] %v813
      %818 = vst [vmem:[%s244 + $0x8] sm:$0xff] %v815
      %v819 = vld [vmem:[%s239] sm:$0xff]
      %v821 = vcombine.high %v819, %v819
      %823 = vst [vmem:[%s244 + $0x10] sm:$0xf] %v819
      %824 = vst [vmem:[%s244 + $0x18] sm:$0xf] %v821
      %p825 = scmp.lt.s32.totalorder %s16, 1
      %s826 = scalar_select %p825, %s16, 1
      %s827 = smul.addr %s826, 4
      %s828 = smul.addr %s827, 8
      %s829 = scalar_lea.vmem %s5, %s828
      // Predicated region
      $region41: #{bottleneck_forward.3} parent=39 // pred_check
        %p830 = pneg %p149
      $region42: #{bottleneck_forward.3} parent=39 // pred_check_branch
        %832 = sbr.rel (%p830) target = $region44
      $region43: #{bottleneck_forward.3} parent=39 // pred_region
        _
      $region44: #{bottleneck_forward.3} parent=39 // pred_fallthru
        _
    $region40: #{bottleneck_forward.3} parent=5 // pred_fallthru
      _
    %p833 = scmp.le.s32.totalorder 2, %s11
    // Predicated region
    $region45: #{bottleneck_forward.3} parent=5 // pred_check
      %p834 = pneg %p833
    $region46: #{bottleneck_forward.3} parent=5 // pred_check_branch
      %836 = sbr.rel (%p834) target = $region48
    $region47: #{bottleneck_forward.3} parent=5 // pred_region
      %s837 = ssub.s32 %s11, 2
      // Predicated region
      $region49: #{bottleneck_forward.3} parent=47 // pred_check
        %p838 = pneg %p155
      $region50: #{bottleneck_forward.3} parent=47 // pred_check_branch
        %840 = sbr.rel (%p838) target = $region52
      $region51: #{bottleneck_forward.3} parent=47 // pred_region
        %p841 = scmp.lt.s32.totalorder %s17, 1
        %s842 = scalar_select %p841, %s17, 1
        %s843 = smul.addr %s842, 4
        %s844 = smul.addr %s843, 8
        %s845 = scalar_lea.vmem %s5, %s844
      $region52: #{bottleneck_forward.3} parent=47 // pred_fallthru
        _
    $region48: #{bottleneck_forward.3} parent=5 // pred_fallthru
      _
  $region6: #{bottleneck_forward.3} parent=0 // loop_footer
    %s15 = sadd.s32 1, %s11
  $region7: #{bottleneck_forward.3} parent=0 // loop_footer_branch
    %10 = sbr.rel target = $region3
  $region8: #{bottleneck_forward.3} parent=0 // loop_exit
    _

// kernel: bottleneck_forward.2
$region0: #{bottleneck_forward.2}
  #allocation0 [shape = 'u32[]', space=smem, size = 0x4, offset = 0x4, fixed_abs, tag = 'smem constant byte address 0x4 - core index']
  #allocation1 [shape = 'u32[144,128]{1,0:T(1,128)}', space=vmem, size = 0x12000, scoped, tag = 'internal scratch']
  %s0 = inlined_call_operand.vmem [shape: f32[2,4,256], index: 0, kind: input, shape index: {}]
  %s1 = inlined_call_operand.vmem [shape: f32[4,1], index: 1, kind: input, shape index: {}]
  %s2 = inlined_call_operand.vmem [shape: f32[4,1], index: 2, kind: input, shape index: {}]
  %s3 = inlined_call_operand.vmem [shape: f32[32,4], index: 3, kind: input, shape index: {}]
  %s4 = inlined_call_operand.vmem [shape: f32[2,32,256], index: 4, kind: output, shape index: {0}]
  %s5 = inlined_call_operand.vmem [shape: f32[2,32,2], index: 5, kind: output, shape index: {1}]
  %6 = xla_tuple %s4, %s5
  %s7 = sld [smem:[#allocation0]]
  $region57: #{bottleneck_forward.2} parent=0
    _
  %s9 = ssub.s32 1, %s7
  %s10 = scalar_select 0, %s9, %s7
  loop: start=0, step=1, limit=4
  $region2: #{bottleneck_forward.2} parent=0 // loop_pre_header
    _
  $region3: #{bottleneck_forward.2} parent=0 // loop_header
    %s12 = sphi 0, %s16
    %p13 = scmp.ge.s32.totalorder %s12, 4
    %s22 = sphi 0, %s24
    %s25 = sphi 0, %s22
    %s26 = sphi 0, %s25
    %s42 = sphi 0, %s26
    %s46 = sphi 0, %s46
    %s48 = sphi 0, %s46
    %s49 = sphi 0, %s48
    %s63 = sphi 0, %s49
    %s67 = sphi 0, %s67
    %s69 = sphi 0, %s67
    %s70 = sphi 0, %s69
    %s84 = sphi 0, %s70
    %s88 = sphi 0, %s88
    %s90 = sphi 0, %s88
    %s91 = sphi 0, %s90
    %s105 = sphi 0, %s91
    %s111 = sphi 0, %s113
    %s114 = sphi 0, %s111
    %s115 = sphi 0, %s114
    %s131 = sphi 0, %s115
    %s137 = sphi 0, %s139
    %s140 = sphi 0, %s137
    %s141 = sphi 0, %s140
    %s157 = sphi 0, %s141
  $region4: #{bottleneck_forward.2} parent=0 // loop_header_branch
    %15 = sbr.rel (%p13) target = $region8
  $region5: #{bottleneck_forward.2} parent=0 // loop_body
    %s17 = ssub.s32 %s12, 1
    %s18 = ssub.s32 %s12, 2
    %s19 = sadd.s32 %s12, 1
    %s20 = ssub.s32 %s12, %s19
    %p21 = scmp.eq.s32.totalorder %s20, 0
    %s23 = sadd.s32 %s22, 1
    %s24 = scalar_select %p21, %s22, %s23
    %p27 = pneg %p21
    %p28 = scmp.eq.s32.totalorder %s12, 1
    %p29 = por %p27, %p28
    %p30 = scmp.ne.s32.totalorder %s22, %s25
    %p31 = scmp.eq.s32.totalorder %s12, 0
    %p32 = por %p30, %p31
    %p33 = scmp.ne.s32.totalorder %s22, %s25
    %p34 = scmp.eq.s32.totalorder %s17, 1
    %p35 = por %p33, %p34
    %p36 = scmp.ne.s32.totalorder %s25, %s26
    %p37 = scmp.eq.s32.totalorder %s17, 0
    %p38 = por %p36, %p37
    %p39 = scmp.ne.s32.totalorder %s25, %s26
    %p40 = scmp.eq.s32.totalorder %s18, 1
    %p41 = por %p39, %p40
    %p43 = scmp.ne.s32.totalorder %s26, %s42
    %p44 = scmp.eq.s32.totalorder %s18, 0
    %p45 = por %p43, %p44
    %s47 = sadd.s32 %s46, 1
    %p50 = scmp.eq.s32.totalorder %s12, 1
    %p51 = scmp.ne.s32.totalorder %s46, %s48
    %p52 = scmp.eq.s32.totalorder %s12, 0
    %p53 = por %p51, %p52
    %p54 = scmp.ne.s32.totalorder %s46, %s48
    %p55 = scmp.eq.s32.totalorder %s17, 1
    %p56 = por %p54, %p55
    %p57 = scmp.ne.s32.totalorder %s48, %s49
    %p58 = scmp.eq.s32.totalorder %s17, 0
    %p59 = por %p57, %p58
    %p60 = scmp.ne.s32.totalorder %s48, %s49
    %p61 = scmp.eq.s32.totalorder %s18, 1
    %p62 = por %p60, %p61
    %p64 = scmp.ne.s32.totalorder %s49, %s63
    %p65 = scmp.eq.s32.totalorder %s18, 0
    %p66 = por %p64, %p65
    %s68 = sadd.s32 %s67, 1
    %p71 = scmp.eq.s32.totalorder %s12, 1
    %p72 = scmp.ne.s32.totalorder %s67, %s69
    %p73 = scmp.eq.s32.totalorder %s12, 0
    %p74 = por %p72, %p73
    %p75 = scmp.ne.s32.totalorder %s67, %s69
    %p76 = scmp.eq.s32.totalorder %s17, 1
    %p77 = por %p75, %p76
    %p78 = scmp.ne.s32.totalorder %s69, %s70
    %p79 = scmp.eq.s32.totalorder %s17, 0
    %p80 = por %p78, %p79
    %p81 = scmp.ne.s32.totalorder %s69, %s70
    %p82 = scmp.eq.s32.totalorder %s18, 1
    %p83 = por %p81, %p82
    %p85 = scmp.ne.s32.totalorder %s70, %s84
    %p86 = scmp.eq.s32.totalorder %s18, 0
    %p87 = por %p85, %p86
    %s89 = sadd.s32 %s88, 1
    %p92 = scmp.eq.s32.totalorder %s12, 1
    %p93 = scmp.ne.s32.totalorder %s88, %s90
    %p94 = scmp.eq.s32.totalorder %s12, 0
    %p95 = por %p93, %p94
    %p96 = scmp.ne.s32.totalorder %s88, %s90
    %p97 = scmp.eq.s32.totalorder %s17, 1
    %p98 = por %p96, %p97
    %p99 = scmp.ne.s32.totalorder %s90, %s91
    %p100 = scmp.eq.s32.totalorder %s17, 0
    %p101 = por %p99, %p100
    %p102 = scmp.ne.s32.totalorder %s90, %s91
    %p103 = scmp.eq.s32.totalorder %s18, 1
    %p104 = por %p102, %p103
    %p106 = scmp.ne.s32.totalorder %s91, %s105
    %p107 = scmp.eq.s32.totalorder %s18, 0
    %p108 = por %p106, %p107
    %s109 = ssub.s32 %s12, %s19
    %p110 = scmp.eq.s32.totalorder %s109, 0
    %s112 = sadd.s32 %s111, 1
    %s113 = scalar_select %p110, %s111, %s112
    %p116 = pneg %p110
    %p117 = scmp.eq.s32.totalorder %s12, 1
    %p118 = por %p116, %p117
    %p119 = scmp.ne.s32.totalorder %s111, %s114
    %p120 = scmp.eq.s32.totalorder %s12, 0
    %p121 = por %p119, %p120
    %p122 = scmp.ne.s32.totalorder %s111, %s114
    %p123 = scmp.eq.s32.totalorder %s17, 1
    %p124 = por %p122, %p123
    %p125 = scmp.ne.s32.totalorder %s114, %s115
    %p126 = scmp.eq.s32.totalorder %s17, 0
    %p127 = por %p125, %p126
    %p128 = scmp.ne.s32.totalorder %s114, %s115
    %p129 = scmp.eq.s32.totalorder %s18, 1
    %p130 = por %p128, %p129
    %p132 = scmp.ne.s32.totalorder %s115, %s131
    %p133 = scmp.eq.s32.totalorder %s18, 0
    %p134 = por %p132, %p133
    %s135 = ssub.s32 %s12, %s19
    %p136 = scmp.eq.s32.totalorder %s135, 0
    %s138 = sadd.s32 %s137, 1
    %s139 = scalar_select %p136, %s137, %s138
    %p142 = pneg %p136
    %p143 = scmp.eq.s32.totalorder %s12, 1
    %p144 = por %p142, %p143
    %p145 = scmp.ne.s32.totalorder %s137, %s140
    %p146 = scmp.eq.s32.totalorder %s12, 0
    %p147 = por %p145, %p146
    %p148 = scmp.ne.s32.totalorder %s137, %s140
    %p149 = scmp.eq.s32.totalorder %s17, 1
    %p150 = por %p148, %p149
    %p151 = scmp.ne.s32.totalorder %s140, %s141
    %p152 = scmp.eq.s32.totalorder %s17, 0
    %p153 = por %p151, %p152
    %p154 = scmp.ne.s32.totalorder %s140, %s141
    %p155 = scmp.eq.s32.totalorder %s18, 1
    %p156 = por %p154, %p155
    %p158 = scmp.ne.s32.totalorder %s141, %s157
    %p159 = scmp.eq.s32.totalorder %s18, 0
    %p160 = por %p158, %p159
    %p161 = scmp.le.s32.totalorder 1, %s12
    %p162 = scmp.lt.s32.totalorder %s12, 3
    %p163 = pnand %p161, %p162
    %p164 = pneg %p163
    // Predicated region
    $region9: #{bottleneck_forward.2} parent=5 // pred_check
      _
    $region10: #{bottleneck_forward.2} parent=5 // pred_check_branch
      %166 = sbr.rel (%p163) target = $region12
    $region11: #{bottleneck_forward.2} parent=5 // pred_region
      %s167 = ssub.s32 %s12, 1
      // Predicated region
      $region13: #{bottleneck_forward.2} parent=11 // pred_check
        %p168 = pneg %p59
      $region14: #{bottleneck_forward.2} parent=11 // pred_check_branch
        %170 = sbr.rel (%p168) target = $region16
      $region15: #{bottleneck_forward.2} parent=11 // pred_region
        _
      $region16: #{bottleneck_forward.2} parent=11 // pred_fallthru
        _
      // Predicated region
      $region17: #{bottleneck_forward.2} parent=11 // pred_check
        %p171 = pneg %p80
      $region18: #{bottleneck_forward.2} parent=11 // pred_check_branch
        %173 = sbr.rel (%p171) target = $region20
      $region19: #{bottleneck_forward.2} parent=11 // pred_region
        _
      $region20: #{bottleneck_forward.2} parent=11 // pred_fallthru
        _
      // Predicated region
      $region21: #{bottleneck_forward.2} parent=11 // pred_check
        %p174 = pneg %p101
      $region22: #{bottleneck_forward.2} parent=11 // pred_check_branch
        %176 = sbr.rel (%p174) target = $region24
      $region23: #{bottleneck_forward.2} parent=11 // pred_region
        _
      $region24: #{bottleneck_forward.2} parent=11 // pred_fallthru
        _
    $region12: #{bottleneck_forward.2} parent=5 // pred_fallthru
      _
    %p177 = scmp.lt.s32.totalorder %s12, 2
    // Predicated region
    $region25: #{bottleneck_forward.2} parent=5 // pred_check
      %p178 = pneg %p177
    $region26: #{bottleneck_forward.2} parent=5 // pred_check_branch
      %180 = sbr.rel (%p178) target = $region28
    $region27: #{bottleneck_forward.2} parent=5 // pred_region
      // Predicated region
      $region29: #{bottleneck_forward.2} parent=27 // pred_check
        %p181 = pneg %p32
      $region30: #{bottleneck_forward.2} parent=27 // pred_check_branch
        %183 = sbr.rel (%p181) target = $region32
      $region31: #{bottleneck_forward.2} parent=27 // pred_region
        %p184 = scmp.lt.s32.totalorder %s12, 1
        %s185 = scalar_select %p184, %s12, 1
        %s186 = smul.addr %s185, 2
        %s187 = smul.addr %s186, 4
        %s188 = scalar_lea.vmem %s0, %s187
      $region32: #{bottleneck_forward.2} parent=27 // pred_fallthru
        _
    $region28: #{bottleneck_forward.2} parent=5 // pred_fallthru
      _
    %p189 = scmp.le.s32.totalorder 1, %s12
    %p190 = scmp.lt.s32.totalorder %s12, 3
    %p191 = pnand %p189, %p190
    %p192 = pneg %p191
    // Predicated region
    $region33: #{bottleneck_forward.2} parent=5 // pred_check
      _
    $region34: #{bottleneck_forward.2} parent=5 // pred_check_branch
      %194 = sbr.rel (%p191) target = $region36
    $region35: #{bottleneck_forward.2} parent=5 // pred_region
      %s195 = ssub.s32 %s12, 1
      %p196 = scmp.lt.s32.totalorder %s17, 1
      %s197 = scalar_select %p196, %s17, 1
      %s198 = smul.addr %s197, 2
      %s199 = smul.addr %s198, 4
      %s200 = scalar_lea.vmem %s0, %s199
      %p201 = pneg %p38
      %p202 = pneg %p35
      %p203 = pneg %p59
      %p204 = pneg %p56
      %p205 = pneg %p80
      %p206 = pneg %p77
      %p207 = pneg %p101
      %p208 = pneg %p98
      %p209 = pneg %p127
      %p210 = pneg %p124
      %p211 = scmp.lt.s32.totalorder %s17, 1
      %s212 = scalar_select %p211, %s17, 1
      %s213 = smul.addr %s212, 8
      %s214 = smul.addr %s213, 8
      %s215 = scalar_lea.vmem %s4, %s214
      %p216 = pneg %p153
      %p217 = pneg %p150
      %p218 = scmp.lt.s32.totalorder %s17, 1
      %s219 = scalar_select %p218, %s17, 1
      %s220 = smul.addr %s219, 4
      %s221 = smul.addr %s220, 8
      %s222 = scalar_lea.vmem %s5, %s221
      %p223 = scmp.lt.s32.totalorder %s17, 1
      %s224 = scalar_select %p223, %s17, 1
      %s225 = smul.addr %s224, 2
      %s226 = smul.addr %s225, 4
      %s227 = scalar_lea.vmem %s0, %s226
      %p228 = scmp.lt.s32.totalorder %s17, 1
      %s229 = scalar_select %p228, %s17, 1
      %s230 = smul.addr %s229, 8
      %s231 = smul.addr %s230, 8
      %s232 = scalar_lea.vmem %s4, %s231
      %p233 = scmp.lt.s32.totalorder %s17, 1
      %s234 = scalar_select %p233, %s17, 1
      %s235 = smul.addr %s234, 4
      %s236 = smul.addr %s235, 8
      %s237 = scalar_lea.vmem %s5, %s236
      %v238 = vld [vmem:[%s1] sm:$0xf]
      %240 = vset.pattern.permute.xlu0 0
      %241 = vperm.xlu0 %240, %v238
      %v242 = vpop.permute.xlu0 %241
      %v243 = vld [vmem:[%s2] sm:$0xf]
      %245 = vset.pattern.permute.xlu0 0
      %246 = vperm.xlu0 %245, %v243
      %v247 = vpop.permute.xlu0 %246
      %v248 = vld [vmem:[%s3] sm:$0xff]
      %v249 = vld [vmem:[%s3 + $0x8] sm:$0xff]
      %v250 = vld [vmem:[%s3 + $0x10] sm:$0xff]
      %v251 = vld [vmem:[%s3 + $0x18] sm:$0xff]
      %v252 = vld [vmem:[%s227] sm:$0xff]
      %v254 = vunpack.c.l.s4 839922192
      %v255 = vunpack.c.0.s8 %v254
      %v256 = vlaneseq
      %v257 = vshrl.u32 %v256, 7
      %v258 = vsub.s32 %v255, %v257
      %v259 = vrot.slane %v242, %v258
      %v261 = vmul.f32 %v252, %v259
      %v263 = vunpack.c.l.s4 839922192
      %v264 = vunpack.c.0.s8 %v263
      %v265 = vlaneseq
      %v266 = vshrl.u32 %v265, 7
      %v267 = vsub.s32 %v264, %v266
      %v268 = vrot.slane %v247, %v267
      %v270 = vadd.f32 %v261, %v268
      %v271 = vmax.f32 %v270, 0.0
      %273 = vset.pattern.permute.xlu0 0
      %274 = vperm.xlu0 %273, %v248
      %v275 = vpop.permute.xlu0 %274
      %278 = vset.pattern.permute.xlu0 0
      %279 = vperm.xlu0 %278, %v249
      %v280 = vpop.permute.xlu0 %279
      %283 = vset.pattern.permute.xlu0 0
      %284 = vperm.xlu0 %283, %v250
      %v285 = vpop.permute.xlu0 %284
      %288 = vset.pattern.permute.xlu0 0
      %289 = vperm.xlu0 %288, %v251
      %v290 = vpop.permute.xlu0 %289
      %v293 = vlaneseq
      %v294 = vshrl.u32 %v293, 7
      %v295 = vsub.s32 0, %v294
      %v296 = vrot.slane %v271, %v295
      %v297 = vlaneseq
      %v298 = vshrl.u32 %v297, 7
      %v299 = vsub.s32 4, %v298
      %v300 = vrot.slane %v271, %v299
      %v303 = vlaneseq
      %v304 = vshrl.u32 %v303, 7
      %v305 = vsub.s32 0, %v304
      %v306 = vrot.slane %v296, %v305
      %v307 = vlaneseq
      %v308 = vshrl.u32 %v307, 7
      %v309 = vsub.s32 0, %v308
      %v310 = vrot.slane %v300, %v309
      %v311 = vmul.f32 %v275, %v306
      %v312 = vmul.f32 %v275, %v310
      %v313 = vmul.f32 %v280, %v306
      %v314 = vmul.f32 %v280, %v310
      %v315 = vmul.f32 %v285, %v306
      %v316 = vmul.f32 %v285, %v310
      %v317 = vmul.f32 %v290, %v306
      %v318 = vmul.f32 %v290, %v310
      %319 = vset.pattern.permute.xlu0 1
      %320 = vperm.xlu0 %319, %v248
      %v321 = vpop.permute.xlu0 %320
      %323 = vset.pattern.permute.xlu0 1
      %324 = vperm.xlu0 %323, %v249
      %v325 = vpop.permute.xlu0 %324
      %327 = vset.pattern.permute.xlu0 1
      %328 = vperm.xlu0 %327, %v250
      %v329 = vpop.permute.xlu0 %328
      %331 = vset.pattern.permute.xlu0 1
      %332 = vperm.xlu0 %331, %v251
      %v333 = vpop.permute.xlu0 %332
      %v335 = vlaneseq
      %v336 = vshrl.u32 %v335, 7
      %v337 = vsub.s32 1, %v336
      %v338 = vrot.slane %v271, %v337
      %v339 = vlaneseq
      %v340 = vshrl.u32 %v339, 7
      %v341 = vsub.s32 5, %v340
      %v342 = vrot.slane %v271, %v341
      %v345 = vlaneseq
      %v346 = vshrl.u32 %v345, 7
      %v347 = vsub.s32 1, %v346
      %v348 = vrot.slane %v338, %v347
      %v349 = vlaneseq
      %v350 = vshrl.u32 %v349, 7
      %v351 = vsub.s32 1, %v350
      %v352 = vrot.slane %v342, %v351
      %v353 = vmul.f32 %v321, %v348
      %v354 = vmul.f32 %v321, %v352
      %v355 = vmul.f32 %v325, %v348
      %v356 = vmul.f32 %v325, %v352
      %v357 = vmul.f32 %v329, %v348
      %v358 = vmul.f32 %v329, %v352
      %v359 = vmul.f32 %v333, %v348
      %v360 = vmul.f32 %v333, %v352
      %v361 = vadd.f32 %v311, %v353
      %v362 = vadd.f32 %v312, %v354
      %v363 = vadd.f32 %v313, %v355
      %v364 = vadd.f32 %v314, %v356
      %v365 = vadd.f32 %v315, %v357
      %v366 = vadd.f32 %v316, %v358
      %v367 = vadd.f32 %v317, %v359
      %v368 = vadd.f32 %v318, %v360
      %369 = vset.pattern.permute.xlu0 2
      %370 = vperm.xlu0 %369, %v248
      %v371 = vpop.permute.xlu0 %370
      %373 = vset.pattern.permute.xlu0 2
      %374 = vperm.xlu0 %373, %v249
      %v375 = vpop.permute.xlu0 %374
      %377 = vset.pattern.permute.xlu0 2
      %378 = vperm.xlu0 %377, %v250
      %v379 = vpop.permute.xlu0 %378
      %381 = vset.pattern.permute.xlu0 2
      %382 = vperm.xlu0 %381, %v251
      %v383 = vpop.permute.xlu0 %382
      %v385 = vlaneseq
      %v386 = vshrl.u32 %v385, 7
      %v387 = vsub.s32 2, %v386
      %v388 = vrot.slane %v271, %v387
      %v389 = vlaneseq
      %v390 = vshrl.u32 %v389, 7
      %v391 = vsub.s32 6, %v390
      %v392 = vrot.slane %v271, %v391
      %v395 = vlaneseq
      %v396 = vshrl.u32 %v395, 7
      %v397 = vsub.s32 2, %v396
      %v398 = vrot.slane %v388, %v397
      %v399 = vlaneseq
      %v400 = vshrl.u32 %v399, 7
      %v401 = vsub.s32 2, %v400
      %v402 = vrot.slane %v392, %v401
      %v403 = vmul.f32 %v371, %v398
      %v404 = vmul.f32 %v371, %v402
      %v405 = vmul.f32 %v375, %v398
      %v406 = vmul.f32 %v375, %v402
      %v407 = vmul.f32 %v379, %v398
      %v408 = vmul.f32 %v379, %v402
      %v409 = vmul.f32 %v383, %v398
      %v410 = vmul.f32 %v383, %v402
      %v411 = vadd.f32 %v361, %v403
      %v412 = vadd.f32 %v362, %v404
      %v413 = vadd.f32 %v363, %v405
      %v414 = vadd.f32 %v364, %v406
      %v415 = vadd.f32 %v365, %v407
      %v416 = vadd.f32 %v366, %v408
      %v417 = vadd.f32 %v367, %v409
      %v418 = vadd.f32 %v368, %v410
      %419 = vset.pattern.permute.xlu0 3
      %420 = vperm.xlu0 %419, %v248
      %v421 = vpop.permute.xlu0 %420
      %423 = vset.pattern.permute.xlu0 3
      %424 = vperm.xlu0 %423, %v249
      %v425 = vpop.permute.xlu0 %424
      %427 = vset.pattern.permute.xlu0 3
      %428 = vperm.xlu0 %427, %v250
      %v429 = vpop.permute.xlu0 %428
      %431 = vset.pattern.permute.xlu0 3
      %432 = vperm.xlu0 %431, %v251
      %v433 = vpop.permute.xlu0 %432
      %v435 = vlaneseq
      %v436 = vshrl.u32 %v435, 7
      %v437 = vsub.s32 3, %v436
      %v438 = vrot.slane %v271, %v437
      %v439 = vlaneseq
      %v440 = vshrl.u32 %v439, 7
      %v441 = vsub.s32 7, %v440
      %v442 = vrot.slane %v271, %v441
      %v445 = vlaneseq
      %v446 = vshrl.u32 %v445, 7
      %v447 = vsub.s32 3, %v446
      %v448 = vrot.slane %v438, %v447
      %v449 = vlaneseq
      %v450 = vshrl.u32 %v449, 7
      %v451 = vsub.s32 3, %v450
      %v452 = vrot.slane %v442, %v451
      %v453 = vmul.f32 %v421, %v448
      %v454 = vmul.f32 %v421, %v452
      %v455 = vmul.f32 %v425, %v448
      %v456 = vmul.f32 %v425, %v452
      %v457 = vmul.f32 %v429, %v448
      %v458 = vmul.f32 %v429, %v452
      %v459 = vmul.f32 %v433, %v448
      %v460 = vmul.f32 %v433, %v452
      %v461 = vadd.f32 %v411, %v453
      %v462 = vadd.f32 %v412, %v454
      %v463 = vadd.f32 %v413, %v455
      %v464 = vadd.f32 %v414, %v456
      %v465 = vadd.f32 %v415, %v457
      %v466 = vadd.f32 %v416, %v458
      %v467 = vadd.f32 %v417, %v459
      %v468 = vadd.f32 %v418, %v460
      %469 = vst [vmem:[%s232] sm:$0xff] %v461
      %470 = vst [vmem:[%s232 + $0x8] sm:$0xff] %v462
      %471 = vst [vmem:[%s232 + $0x10] sm:$0xff] %v463
      %472 = vst [vmem:[%s232 + $0x18] sm:$0xff] %v464
      %473 = vst [vmem:[%s232 + $0x20] sm:$0xff] %v465
      %474 = vst [vmem:[%s232 + $0x28] sm:$0xff] %v466
      %475 = vst [vmem:[%s232 + $0x30] sm:$0xff] %v467
      %476 = vst [vmem:[%s232 + $0x38] sm:$0xff] %v468
      %477 = vmatprep.subr.mxu0 0.0
      %478 = vmatpush1.msra.mxu0 1.0
      %479 = vmatprep.subr.mxu0 0.0
      %480 = vmatpush1.msra.mxu0 1.0
      %481 = vmatprep.subr.mxu0 0.0
      %482 = vmatpush1.msra.mxu0 1.0
      %483 = vmatprep.subr.mxu0 0.0
      %484 = vmatpush1.msra.mxu0 1.0
      %485 = vmatprep.subr.mxu0 0.0
      %486 = vmatpush1.msra.mxu0 1.0
      %487 = vmatprep.subr.mxu0 0.0
      %488 = vmatpush1.msra.mxu0 1.0
      %489 = vmatprep.subr.mxu0 0.0
      %490 = vmatpush1.msra.mxu0 1.0
      %491 = vmatprep.subr.mxu0 0.0
      %492 = vmatpush1.msra.mxu0 1.0
      %493 = vmatprep.subr.mxu0 0.0
      %494 = vmatpush1.msra.mxu0 1.0
      %495 = vmatprep.subr.mxu0 0.0
      %496 = vmatpush1.msra.mxu0 1.0
      %497 = vmatprep.subr.mxu0 0.0
      %498 = vmatpush1.msra.mxu0 1.0
      %499 = vmatprep.subr.mxu0 0.0
      %500 = vmatpush1.msra.mxu0 1.0
      %501 = vmatprep.subr.mxu0 0.0
      %502 = vmatpush1.msra.mxu0 1.0
      %503 = vmatprep.subr.mxu0 0.0
      %504 = vmatpush1.msra.mxu0 1.0
      %505 = vmatprep.subr.mxu0 0.0
      %506 = vmatpush1.msra.mxu0 1.0
      %507 = vmatprep.subr.mxu0 0.0
      %508 = vmatpush1.msra.mxu0 1.0
      %509 = vmatprep.subr.mxu0 0.0
      %510 = vmatpush1.msra.mxu0 1.0
      %511 = vmatprep.subr.mxu0 0.0
      %512 = vmatpush1.msra.mxu0 1.0
      %513 = vmatprep.subr.mxu0 0.0
      %514 = vmatpush1.msra.mxu0 1.0
      %515 = vmatprep.subr.mxu0 0.0
      %516 = vmatpush1.msra.mxu0 1.0
      %517 = vmatprep.subr.mxu0 0.0
      %518 = vmatpush1.msra.mxu0 1.0
      %519 = vmatprep.subr.mxu0 0.0
      %520 = vmatpush1.msra.mxu0 1.0
      %521 = vmatprep.subr.mxu0 0.0
      %522 = vmatpush1.msra.mxu0 1.0
      %523 = vmatprep.subr.mxu0 0.0
      %524 = vmatpush1.msra.mxu0 1.0
      %525 = vmatprep.subr.mxu0 0.0
      %526 = vmatpush1.msra.mxu0 1.0
      %527 = vmatprep.subr.mxu0 0.0
      %528 = vmatpush1.msra.mxu0 1.0
      %529 = vmatprep.subr.mxu0 0.0
      %530 = vmatpush1.msra.mxu0 1.0
      %531 = vmatprep.subr.mxu0 0.0
      %532 = vmatpush1.msra.mxu0 1.0
      %533 = vmatprep.subr.mxu0 0.0
      %534 = vmatpush1.msra.mxu0 1.0
      %535 = vmatprep.subr.mxu0 0.0
      %536 = vmatpush1.msra.mxu0 1.0
      %537 = vmatprep.subr.mxu0 0.0
      %538 = vmatpush1.msra.mxu0 1.0
      %539 = vmatprep.subr.mxu0 0.0
      %540 = vmatpush1.msra.mxu0 1.0
      %541 = vmatprep.mubr.f32.mxu0 %v462
      %542 = vmatmul.mubr.f32.gmra.mrb[0].mxu0 %v461
      %v543 = vpop.f32.mrb[0].mxu0
      %v544 = vadd.f32 0.0, %v543
      %v545 = vpop.f32.mrb[0].mxu0
      %546 = vmatprep.mubr.f32.mxu0 %v464
      %547 = vmatmul.mubr.f32.gmra.mrb[0].mxu0 %v463
      %v548 = vpop.f32.mrb[0].mxu0
      %v549 = vadd.f32 0.0, %v548
      %v550 = vpop.f32.mrb[0].mxu0
      %551 = vmatprep.mubr.f32.mxu0 %v466
      %552 = vmatmul.mubr.f32.gmra.mrb[0].mxu0 %v465
      %v553 = vpop.f32.mrb[0].mxu0
      %v554 = vadd.f32 0.0, %v553
      %v555 = vpop.f32.mrb[0].mxu0
      %556 = vmatprep.mubr.f32.mxu0 %v468
      %557 = vmatmul.mubr.f32.gmra.mrb[0].mxu0 %v467
      %v558 = vpop.f32.mrb[0].mxu0
      %v559 = vadd.f32 0.0, %v558
      %v560 = vpop.f32.mrb[0].mxu0
      %561 = vdwg.mxu0
      %v562 = vmul.f32 %v461, %v461
      %v563 = vmul.f32 %v462, %v462
      %v564 = vmul.f32 %v463, %v463
      %v565 = vmul.f32 %v464, %v464
      %v566 = vmul.f32 %v465, %v465
      %v567 = vmul.f32 %v466, %v466
      %v568 = vmul.f32 %v467, %v467
      %v569 = vmul.f32 %v468, %v468
      %570 = vmatprep.subr.mxu0 0.0
      %571 = vmatpush1.msra.mxu0 1.0
      %572 = vmatprep.subr.mxu0 0.0
      %573 = vmatpush1.msra.mxu0 1.0
      %574 = vmatprep.subr.mxu0 0.0
      %575 = vmatpush1.msra.mxu0 1.0
      %576 = vmatprep.subr.mxu0 0.0
      %577 = vmatpush1.msra.mxu0 1.0
      %578 = vmatprep.subr.mxu0 0.0
      %579 = vmatpush1.msra.mxu0 1.0
      %580 = vmatprep.subr.mxu0 0.0
      %581 = vmatpush1.msra.mxu0 1.0
      %582 = vmatprep.subr.mxu0 0.0
      %583 = vmatpush1.msra.mxu0 1.0
      %584 = vmatprep.subr.mxu0 0.0
      %585 = vmatpush1.msra.mxu0 1.0
      %586 = vmatprep.subr.mxu0 0.0
      %587 = vmatpush1.msra.mxu0 1.0
      %588 = vmatprep.subr.mxu0 0.0
      %589 = vmatpush1.msra.mxu0 1.0
      %590 = vmatprep.subr.mxu0 0.0
      %591 = vmatpush1.msra.mxu0 1.0
      %592 = vmatprep.subr.mxu0 0.0
      %593 = vmatpush1.msra.mxu0 1.0
      %594 = vmatprep.subr.mxu0 0.0
      %595 = vmatpush1.msra.mxu0 1.0
      %596 = vmatprep.subr.mxu0 0.0
      %597 = vmatpush1.msra.mxu0 1.0
      %598 = vmatprep.subr.mxu0 0.0
      %599 = vmatpush1.msra.mxu0 1.0
      %600 = vmatprep.subr.mxu0 0.0
      %601 = vmatpush1.msra.mxu0 1.0
      %602 = vmatprep.subr.mxu0 0.0
      %603 = vmatpush1.msra.mxu0 1.0
      %604 = vmatprep.subr.mxu0 0.0
      %605 = vmatpush1.msra.mxu0 1.0
      %606 = vmatprep.subr.mxu0 0.0
      %607 = vmatpush1.msra.mxu0 1.0
      %608 = vmatprep.subr.mxu0 0.0
      %609 = vmatpush1.msra.mxu0 1.0
      %610 = vmatprep.subr.mxu0 0.0
      %611 = vmatpush1.msra.mxu0 1.0
      %612 = vmatprep.subr.mxu0 0.0
      %613 = vmatpush1.msra.mxu0 1.0
      %614 = vmatprep.subr.mxu0 0.0
      %615 = vmatpush1.msra.mxu0 1.0
      %616 = vmatprep.subr.mxu0 0.0
      %617 = vmatpush1.msra.mxu0 1.0
      %618 = vmatprep.subr.mxu0 0.0
      %619 = vmatpush1.msra.mxu0 1.0
      %620 = vmatprep.subr.mxu0 0.0
      %621 = vmatpush1.msra.mxu0 1.0
      %622 = vmatprep.subr.mxu0 0.0
      %623 = vmatpush1.msra.mxu0 1.0
      %624 = vmatprep.subr.mxu0 0.0
      %625 = vmatpush1.msra.mxu0 1.0
      %626 = vmatprep.subr.mxu0 0.0
      %627 = vmatpush1.msra.mxu0 1.0
      %628 = vmatprep.subr.mxu0 0.0
      %629 = vmatpush1.msra.mxu0 1.0
      %630 = vmatprep.subr.mxu0 0.0
      %631 = vmatpush1.msra.mxu0 1.0
      %632 = vmatprep.subr.mxu0 0.0
      %633 = vmatpush1.msra.mxu0 1.0
      %634 = vmatprep.mubr.f32.mxu0 %v563
      %635 = vmatmul.mubr.f32.gmra.mrb[0].mxu0 %v562
      %v636 = vpop.f32.mrb[0].mxu0
      %v637 = vadd.f32 0.0, %v636
      %v638 = vpop.f32.mrb[0].mxu0
      %639 = vmatprep.mubr.f32.mxu0 %v565
      %640 = vmatmul.mubr.f32.gmra.mrb[0].mxu0 %v564
      %v641 = vpop.f32.mrb[0].mxu0
      %v642 = vadd.f32 0.0, %v641
      %v643 = vpop.f32.mrb[0].mxu0
      %644 = vmatprep.mubr.f32.mxu0 %v567
      %645 = vmatmul.mubr.f32.gmra.mrb[0].mxu0 %v566
      %v646 = vpop.f32.mrb[0].mxu0
      %v647 = vadd.f32 0.0, %v646
      %v648 = vpop.f32.mrb[0].mxu0
      %649 = vmatprep.mubr.f32.mxu0 %v569
      %650 = vmatmul.mubr.f32.gmra.mrb[0].mxu0 %v568
      %v651 = vpop.f32.mrb[0].mxu0
      %v652 = vadd.f32 0.0, %v651
      %v653 = vpop.f32.mrb[0].mxu0
      %654 = vdwg.mxu0
      %659 = vrot.lane.b32.xlu0 %v637, 1
      %v660 = vpop.permute.xlu0 %659
      %661 = vrot.lane.b32.xlu0 %v642, 1
      %v662 = vpop.permute.xlu0 %661
      %663 = vrot.lane.b32.xlu0 %v647, 1
      %v664 = vpop.permute.xlu0 %663
      %665 = vrot.lane.b32.xlu0 %v652, 1
      %v666 = vpop.permute.xlu0 %665
      %vm671 = vcmask 7168
      %v672 = vsel %vm671, %v544, %v660
      %v673 = vsel %vm671, %v549, %v662
      %v674 = vsel %vm671, %v554, %v664
      %v675 = vsel %vm671, %v559, %v666
      %vm676 = vcmask 15360
      %677 = vst.msk [vmem:[%s237] sm:$0xff] %vm676, %v672
      %678 = vst.msk [vmem:[%s237 + $0x8] sm:$0xff] %vm676, %v673
      %679 = vst.msk [vmem:[%s237 + $0x10] sm:$0xff] %vm676, %v674
      %680 = vst.msk [vmem:[%s237 + $0x18] sm:$0xff] %vm676, %v675
      %p681 = scmp.lt.s32.totalorder %s17, 1
      %s682 = scalar_select %p681, %s17, 1
      %s683 = smul.addr %s682, 8
      %s684 = smul.addr %s683, 8
      %s685 = scalar_lea.vmem %s4, %s684
      %p686 = scmp.lt.s32.totalorder %s17, 1
      %s687 = scalar_select %p686, %s17, 1
      %s688 = smul.addr %s687, 4
      %s689 = smul.addr %s688, 8
      %s690 = scalar_lea.vmem %s5, %s689
      // Predicated region
      $region37: #{bottleneck_forward.2} parent=35 // pred_check
        %p691 = pneg %p124
      $region38: #{bottleneck_forward.2} parent=35 // pred_check_branch
        %693 = sbr.rel (%p691) target = $region40
      $region39: #{bottleneck_forward.2} parent=35 // pred_region
        _
      $region40: #{bottleneck_forward.2} parent=35 // pred_fallthru
        _
      // Predicated region
      $region41: #{bottleneck_forward.2} parent=35 // pred_check
        %p694 = pneg %p150
      $region42: #{bottleneck_forward.2} parent=35 // pred_check_branch
        %696 = sbr.rel (%p694) target = $region44
      $region43: #{bottleneck_forward.2} parent=35 // pred_region
        _
      $region44: #{bottleneck_forward.2} parent=35 // pred_fallthru
        _
    $region36: #{bottleneck_forward.2} parent=5 // pred_fallthru
      _
    %p697 = scmp.le.s32.totalorder 2, %s12
    // Predicated region
    $region45: #{bottleneck_forward.2} parent=5 // pred_check
      %p698 = pneg %p697
    $region46: #{bottleneck_forward.2} parent=5 // pred_check_branch
      %700 = sbr.rel (%p698) target = $region48
    $region47: #{bottleneck_forward.2} parent=5 // pred_region
      %s701 = ssub.s32 %s12, 2
      // Predicated region
      $region49: #{bottleneck_forward.2} parent=47 // pred_check
        %p702 = pneg %p130
      $region50: #{bottleneck_forward.2} parent=47 // pred_check_branch
        %704 = sbr.rel (%p702) target = $region52
      $region51: #{bottleneck_forward.2} parent=47 // pred_region
        %p705 = scmp.lt.s32.totalorder %s18, 1
        %s706 = scalar_select %p705, %s18, 1
        %s707 = smul.addr %s706, 8
        %s708 = smul.addr %s707, 8
        %s709 = scalar_lea.vmem %s4, %s708
      $region52: #{bottleneck_forward.2} parent=47 // pred_fallthru
        _
      // Predicated region
      $region53: #{bottleneck_forward.2} parent=47 // pred_check
        %p710 = pneg %p156
      $region54: #{bottleneck_forward.2} parent=47 // pred_check_branch
        %712 = sbr.rel (%p710) target = $region56
      $region55: #{bottleneck_forward.2} parent=47 // pred_region
        %p713 = scmp.lt.s32.totalorder %s18, 1
        %s714 = scalar_select %p713, %s18, 1
        %s715 = smul.addr %s714, 4
        %s716 = smul.addr %s715, 8
        %s717 = scalar_lea.vmem %s5, %s716
      $region56: #{bottleneck_forward.2} parent=47 // pred_fallthru
        _
    $region48: #{bottleneck_forward.2} parent=5 // pred_fallthru
      _
  $region6: #{bottleneck_forward.2} parent=0 // loop_footer
    %s16 = sadd.s32 1, %s12
  $region7: #{bottleneck_forward.2} parent=0 // loop_footer_branch
    %11 = sbr.rel target = $region3
  $region8: #{bottleneck_forward.2} parent=0 // loop_exit
    _

</llo_original>
